<compile_context>
chip_gen: v5e
topology: v5e:2x2
jax: 0.10.0
libtpu: 0.0.40
codegen_flags: <defaults>
</compile_context>

<pallas_src>
import functools

import numpy as np
import jax
import jax.numpy as jnp
from jax.experimental import pallas as pl
from jax.experimental.pallas import tpu as pltpu

# ---------------- scaled-down PspNet hyper-params -----------------
WIDTH_DIV = 16
STEM = 64 // WIDTH_DIV                                   # stem conv channels
PLANES = [64 // WIDTH_DIV, 128 // WIDTH_DIV,
          256 // WIDTH_DIV, 512 // WIDTH_DIV]            # bottleneck planes
EXP = 4                                                  # bottleneck expansion
PPM_OUT = 512 // WIDTH_DIV                               # PPM branch channels
BINS = (1, 2, 3, 6)
NUM_CLASS = 6

LANE = 128
_VMEM_LIMIT = 32 * 1024 * 1024        # safe on v5e/v6e (128 MiB) and v7x (64 MiB)
_BLOCK_BUDGET = 12 * 1024 * 1024      # double-buffered block footprint budget


def _round_up(x, m):
    return ((x + m - 1) // m) * m


def _choose_tm(M, K, N, x_bytes):
    """Largest row tile (multiple of 128) whose double-buffered blocks fit the
    VMEM budget and whose padding waste stays small."""
    m128 = _round_up(M, 128)
    for tm in (1024, 512, 256):
        if tm > m128:
            continue
        if _round_up(M, tm) > m128 + tm // 2:   # avoid large padding waste
            continue
        need = 2 * (tm * K * x_bytes + K * N * x_bytes + tm * N * 4) + 4 * N * 4
        if need <= _BLOCK_BUDGET:
            return tm
    return 128


# ======================= Pallas kernels ===========================

def _mm_bias_kernel(x_ref, w_ref, b_ref, o_ref, *, relu):
    acc = jnp.dot(x_ref[...], w_ref[...], preferred_element_type=jnp.float32)
    acc = acc + b_ref[...]
    if relu:
        acc = jnp.maximum(acc, 0.0)
    o_ref[...] = acc


def _mm_bias_res_kernel(x_ref, w_ref, b_ref, r_ref, o_ref):
    # fused conv(1x1) + bias + residual add + ReLU  (bottleneck merge)
    acc = jnp.dot(x_ref[...], w_ref[...], preferred_element_type=jnp.float32)
    o_ref[...] = jnp.maximum(acc + b_ref[...] + r_ref[...], 0.0)


def _mm_kernel(x_ref, w_ref, o_ref):
    o_ref[...] = jnp.dot(x_ref[...], w_ref[...], preferred_element_type=jnp.float32)


def _maxpool_kernel(x_ref, o_ref, *, k2):
    m = x_ref[0]
    for p in range(1, k2):
        m = jnp.maximum(m, x_ref[p])
    o_ref[...] = m


# ======================= Pallas call wrappers ======================

def mm_bias(x, w, bias, relu=False, residual=None):
    """out = relu?((x @ w) + bias [+ residual]).  BN scale is pre-folded into w.
    x:(M,K) [bf16 or f32], w:(K,N), bias:(N,), residual:(M,N) f32."""
    M, K = x.shape
    _, N = w.shape
    tm = _choose_tm(M, K, N, x.dtype.itemsize)
    Mp = _round_up(M, tm)
    xp = jnp.pad(x, ((0, Mp - M), (0, 0)))
    args = [xp, w, bias.astype(jnp.float32).reshape(1, N)]
    in_specs = [pl.BlockSpec((tm, K), lambda i: (i, 0)),
                pl.BlockSpec((K, N), lambda i: (0, 0)),
                pl.BlockSpec((1, N), lambda i: (0, 0))]
    if residual is not None:
        rp = jnp.pad(residual.astype(jnp.float32), ((0, Mp - M), (0, 0)))
        args.append(rp)
        in_specs.append(pl.BlockSpec((tm, N), lambda i: (i, 0)))
        kernel = _mm_bias_res_kernel
    else:
        kernel = functools.partial(_mm_bias_kernel, relu=relu)
    out = pl.pallas_call(
        kernel,
        out_shape=jax.ShapeDtypeStruct((Mp, N), jnp.float32),
        grid=(Mp // tm,),
        in_specs=in_specs,
        out_specs=pl.BlockSpec((tm, N), lambda i: (i, 0)),
        compiler_params=pltpu.CompilerParams(
            dimension_semantics=("parallel",),
            vmem_limit_bytes=_VMEM_LIMIT),
    )(*args)
    return out[:M]


def mm_plain(x, w):
    """out = x @ w (f32).  Used for bilinear / adaptive-pool matrices."""
    M, K = x.shape
    _, N = w.shape
    tm = _choose_tm(M, K, N, x.dtype.itemsize)
    Mp = _round_up(M, tm)
    xp = jnp.pad(x, ((0, Mp - M), (0, 0)))
    out = pl.pallas_call(
        _mm_kernel,
        out_shape=jax.ShapeDtypeStruct((Mp, N), jnp.float32),
        grid=(Mp // tm,),
        in_specs=[pl.BlockSpec((tm, K), lambda i: (i, 0)),
                  pl.BlockSpec((K, N), lambda i: (0, 0))],
        out_specs=pl.BlockSpec((tm, N), lambda i: (i, 0)),
        compiler_params=pltpu.CompilerParams(
            dimension_semantics=("parallel",),
            vmem_limit_bytes=_VMEM_LIMIT),
    )(xp, w)
    return out[:M]


def max_pool(x, k=3, stride=2, pad=1):
    """nn.MaxPool2d(3, 2, 1) over NHWC.  The reduction over the k*k taps runs
    in a Pallas kernel on lane-dense (rows, 128) tiles."""
    N, H, W, C = x.shape
    neg = jnp.finfo(jnp.float32).min
    xp = jnp.pad(x, ((0, 0), (pad, pad), (pad, pad), (0, 0)), constant_values=neg)
    Ho = (H + 2 * pad - k) // stride + 1
    Wo = (W + 2 * pad - k) // stride + 1
    views = []
    for i in range(k):
        for j in range(k):
            views.append(xp[:, i:i + stride * Ho:stride, j:j + stride * Wo:stride, :])
    total = N * Ho * Wo * C
    stacked = jnp.stack(views, 0).reshape(k * k, total)
    rows = (total + LANE - 1) // LANE
    rt = min(512, _round_up(rows, 8))
    rows_p = _round_up(rows, rt)
    stacked = jnp.pad(stacked, ((0, 0), (0, rows_p * LANE - total)))
    stacked = stacked.reshape(k * k, rows_p, LANE)
    out = pl.pallas_call(
        functools.partial(_maxpool_kernel, k2=k * k),
        out_shape=jax.ShapeDtypeStruct((rows_p, LANE), jnp.float32),
        grid=(rows_p // rt,),
        in_specs=[pl.BlockSpec((k * k, rt, LANE), lambda i: (0, i, 0))],
        out_specs=pl.BlockSpec((rt, LANE), lambda i: (i, 0)),
        compiler_params=pltpu.CompilerParams(
            dimension_semantics=("parallel",),
            vmem_limit_bytes=_VMEM_LIMIT),
    )(stacked)
    return out.reshape(-1)[:total].reshape(N, Ho, Wo, C)


# ======================= JAX glue (layout only) ====================

def _extract_patches(x, kh, kw, stride, pad):
    """im2col: NHWC -> (N, Ho, Wo, kh*kw*C), patch index ordering (i, j, c)."""
    N, H, W, C = x.shape
    xp = jnp.pad(x, ((0, 0), (pad, pad), (pad, pad), (0, 0)))
    Ho = (H + 2 * pad - kh) // stride + 1
    Wo = (W + 2 * pad - kw) // stride + 1
    cols = []
    for i in range(kh):
        for j in range(kw):
            cols.append(xp[:, i:i + stride * Ho:stride, j:j + stride * Wo:stride, :])
    return jnp.concatenate(cols, axis=-1), Ho, Wo


def conv2d(x, w, scale, bias, stride=1, relu=False, residual=None):
    """Conv2d (PyTorch 'same'-style padding) + folded BN + optional ReLU, with
    an optional fused residual add (then ReLU).  w is stored HWIO."""
    kh, kw, cin, cout = w.shape
    pad = (kh - 1) // 2
    wf = (w * scale.reshape(1, 1, 1, cout)).astype(jnp.bfloat16)   # fold BN scale
    xb = x.astype(jnp.bfloat16)
    patches, Ho, Wo = _extract_patches(xb, kh, kw, stride, pad)
    Nb = x.shape[0]
    pm = patches.reshape(Nb * Ho * Wo, kh * kw * cin)
    wm = wf.reshape(kh * kw * cin, cout)
    res = None
    if residual is not None:
        res = residual.reshape(Nb * Ho * Wo, cout)
    y = mm_bias(pm, wm, bias, relu=relu, residual=res)
    return y.reshape(Nb, Ho, Wo, cout)


def _bilinear_matrix(out_size, in_size):
    """Row-interpolation matrix matching F.interpolate(mode='bilinear',
    align_corners=False)."""
    A = np.zeros((out_size, in_size), np.float32)
    if in_size == 1:
        A[:, 0] = 1.0
        return jnp.asarray(A)
    scale = in_size / out_size
    for i in range(out_size):
        src = (i + 0.5) * scale - 0.5
        src = min(max(src, 0.0), in_size - 1)
        lo = int(np.floor(src))
        hi = min(lo + 1, in_size - 1)
        w = src - lo
        A[i, lo] += 1.0 - w
        A[i, hi] += w
    return jnp.asarray(A)


def _adaptive_pool_matrix(out_size, in_size):
    """Row-averaging matrix matching nn.AdaptiveAvgPool2d bin boundaries."""
    P = np.zeros((out_size, in_size), np.float32)
    for i in range(out_size):
        start = (i * in_size) // out_size
        end = -(-((i + 1) * in_size) // out_size)  # ceil div
        P[i, start:end] = 1.0 / (end - start)
    return jnp.asarray(P)


def _apply_along_h(x, A):
    """y[n,i,w,c] = sum_h A[i,h] x[n,h,w,c]  (Pallas plain-matmul kernel)."""
    N, H, W, C = x.shape
    O = A.shape[0]
    xt = jnp.transpose(x, (1, 0, 2, 3)).reshape(H, N * W * C)
    y = mm_plain(A, xt)
    return jnp.transpose(y.reshape(O, N, W, C), (1, 0, 2, 3))


def _apply_along_w(x, A):
    N, H, W, C = x.shape
    O = A.shape[0]
    xt = jnp.transpose(x, (2, 0, 1, 3)).reshape(W, N * H * C)
    y = mm_plain(A, xt)
    return jnp.transpose(y.reshape(O, N, H, C), (1, 2, 0, 3))


# ======================= parameter construction ====================

def _conv_w(key, cin, cout, k):
    fan_in = cin * k * k
    return jax.random.normal(key, (k, k, cin, cout), jnp.float32) / np.sqrt(fan_in)


def _bn(key, c, eps=1e-5):
    k1, k2 = jax.random.split(key)
    gamma = 1.0 + 0.1 * jax.random.normal(k1, (c,), jnp.float32)
    beta = 0.1 * jax.random.normal(k2, (c,), jnp.float32)
    mean = jnp.zeros((c,), jnp.float32)
    var = jnp.ones((c,), jnp.float32)
    scale = gamma / jnp.sqrt(var + eps)
    bias = beta - mean * scale
    return scale, bias


def _init_bottleneck(key, cin, planes, stride):
    keys = jax.random.split(key, 8)
    p = {
        'w1': _conv_w(keys[0], cin, planes, 1), 'bn1': _bn(keys[1], planes),
        'w2': _conv_w(keys[2], planes, planes, 3), 'bn2': _bn(keys[3], planes),
        'w3': _conv_w(keys[4], planes, planes * EXP, 1),
        'bn3': _bn(keys[5], planes * EXP),
        'stride': stride,
    }
    if stride != 1 or cin != planes * EXP:
        p['wd'] = _conv_w(keys[6], cin, planes * EXP, 1)
        p['bnd'] = _bn(keys[7], planes * EXP)
    return p


def init_pspnet(key):
    keys = jax.random.split(key, 8)
    params = {'conv1': _conv_w(keys[0], 3, STEM, 7), 'bn1': _bn(keys[1], STEM)}
    strides = [1, 2, 2, 2]
    cin = STEM
    layer_keys = jax.random.split(keys[2], 4)
    for li in range(4):
        # TODO(synk): resnet101 stages have [3, 4, 23, 3] bottlenecks; 1 each here.
        params[f'layer{li + 1}'] = [_init_bottleneck(layer_keys[li], cin,
                                                     PLANES[li], strides[li])]
        cin = PLANES[li] * EXP
    c4 = cin
    params['ppm'] = []
    for bkey in jax.random.split(keys[3], len(BINS)):
        k1, k2 = jax.random.split(bkey)
        params['ppm'].append({'w': _conv_w(k1, c4, PPM_OUT, 1),
                              'bn': _bn(k2, PPM_OUT)})
    concat_c = c4 + len(BINS) * PPM_OUT
    params['final1_w'] = _conv_w(keys[4], concat_c, PPM_OUT, 3)
    params['final1_bn'] = _bn(keys[5], PPM_OUT)
    params['final2_w'] = _conv_w(keys[6], PPM_OUT, NUM_CLASS, 1)
    params['final2_b'] = 0.1 * jax.random.normal(keys[7], (NUM_CLASS,), jnp.float32)
    return params


# =========================== forward ==============================

def _bottleneck_fwd(x, p):
    s1, b1 = p['bn1']
    s2, b2 = p['bn2']
    s3, b3 = p['bn3']
    out = conv2d(x, p['w1'], s1, b1, stride=1, relu=True)
    out = conv2d(out, p['w2'], s2, b2, stride=p['stride'], relu=True)
    if 'wd' in p:
        sd, bd = p['bnd']
        identity = conv2d(x, p['wd'], sd, bd, stride=p['stride'], relu=False)
    else:
        identity = x
    # third 1x1 conv with the residual add + ReLU fused into the matmul kernel
    return conv2d(out, p['w3'], s3, b3, stride=1, relu=True, residual=identity)


def pspnet_forward(params, x_nchw):
    """Eval-mode PspNet forward.  Input NCHW, output NCHW logits at input res."""
    x = jnp.transpose(x_nchw, (0, 2, 3, 1)).astype(jnp.float32)  # -> NHWC
    Hin, Win = x.shape[1], x.shape[2]

    # layer0: conv7x7/s2 + BN + ReLU + maxpool3x3/s2
    s0, b0 = params['bn1']
    x = conv2d(x, params['conv1'], s0, b0, stride=2, relu=True)
    x = max_pool(x, k=3, stride=2, pad=1)

    for li in range(1, 5):
        for blk in params[f'layer{li}']:
            x = _bottleneck_fwd(x, blk)

    # PyramidPoolingModule: adaptive pool -> 1x1 conv+BN+ReLU -> bilinear up -> concat
    # The four 1x1 convs are batched into one lane-dense Pallas matmul call.
    N, H, W, C = x.shape
    feats = [x]
    pooled_rows, w_cols, biases = [], [], []
    for bin_size, pp in zip(BINS, params['ppm']):
        Ph = _adaptive_pool_matrix(bin_size, H)
        Pw = _adaptive_pool_matrix(bin_size, W)
        pooled = _apply_along_w(_apply_along_h(x, Ph), Pw)   # (N, bin, bin, C)
        pooled_rows.append(pooled.reshape(N * bin_size * bin_size, C))
        sb, bb = pp['bn']
        w_cols.append(pp['w'].reshape(C, PPM_OUT) * sb.reshape(1, PPM_OUT))
        biases.append(bb)
    pooled_all = jnp.concatenate(pooled_rows, axis=0).astype(jnp.bfloat16)
    w_all = jnp.concatenate(w_cols, axis=1).astype(jnp.bfloat16)
    b_all = jnp.concatenate(biases, axis=0)
    y_all = mm_bias(pooled_all, w_all, b_all, relu=True)     # (sum rows, 4*PPM_OUT)
    row_off = 0
    for bi, bin_size in enumerate(BINS):
        rc = N * bin_size * bin_size
        yb = y_all[row_off:row_off + rc, bi * PPM_OUT:(bi + 1) * PPM_OUT]
        yb = yb.reshape(N, bin_size, bin_size, PPM_OUT)
        Ah = _bilinear_matrix(H, bin_size)
        Aw = _bilinear_matrix(W, bin_size)
        feats.append(_apply_along_w(_apply_along_h(yb, Ah), Aw))
        row_off += rc
    x = jnp.concatenate(feats, axis=-1)

    # final1: conv3x3 + BN + ReLU (+ Dropout(0.1) = identity in eval)
    s1, b1 = params['final1_bn']
    x = conv2d(x, params['final1_w'], s1, b1, stride=1, relu=True)

    # final2: conv1x1 with bias
    cout = params['final2_w'].shape[-1]
    x = conv2d(x, params['final2_w'], jnp.ones((cout,), jnp.float32),
               params['final2_b'], stride=1, relu=False)

    # F.interpolate(x, input_size, mode='bilinear') (align_corners=False)
    Ah = _bilinear_matrix(Hin, x.shape[1])
    Aw = _bilinear_matrix(Win, x.shape[2])
    x = _apply_along_w(_apply_along_h(x, Ah), Aw)

    return jnp.transpose(x, (0, 3, 1, 2))  # NHWC -> NCHW


# ============================== main ===============================

if __name__ == "__main__":
    key = jax.random.PRNGKey(0)
    pkey, xkey = jax.random.split(key)
    params = init_pspnet(pkey)

    # Input spatial 192 -> output-stride-32 feature map of 6x6 (divides all PPM bins).
    x = jax.random.normal(xkey, (2, 3, 192, 192), jnp.float32)

    out = pspnet_forward(params, x)
    out = jax.block_until_ready(out)

    assert out.shape == (2, NUM_CLASS, 192, 192), out.shape
    assert bool(jnp.all(jnp.isfinite(out)))
    print("KERNEL_OK")
</pallas_src>

<mosaic_0001>
module attributes {stable_mosaic.version = 11 : i64} {
  func.func @_mm_bias_kernel(%arg0: i32, %arg1: memref<1024x147xbf16, #tpu.memory_space<vmem>>, %arg2: memref<147x4xbf16, #tpu.memory_space<vmem>>, %arg3: memref<1x4xf32, #tpu.memory_space<vmem>>, %arg4: memref<1024x4xf32, #tpu.memory_space<vmem>>) attributes {dimension_semantics = [#tpu.dimension_semantics<parallel>], iteration_bounds = array<i64: 18>, scalar_prefetch = 0 : i64, scratch_operands = 0 : i64, tpu.core_type = #tpu.core_type<tc>, window_params = [{transform_indices = @transform_0, window_bounds = array<i64: 1024, 147>}, {pipeline_mode = #tpu.pipeline_mode<synchronous>, transform_indices = @transform_1, window_bounds = array<i64: 147, 4>}, {pipeline_mode = #tpu.pipeline_mode<synchronous>, transform_indices = @transform_2, window_bounds = array<i64: 1, 4>}, {transform_indices = @transform_3, window_bounds = array<i64: 1024, 4>}]} {
    %c0 = arith.constant 0 : index
    %c0_0 = arith.constant 0 : index
    %0 = vector.load %arg1[%c0, %c0_0] : memref<1024x147xbf16, #tpu.memory_space<vmem>>, vector<1024x147xbf16>
    %c0_1 = arith.constant 0 : index
    %c0_2 = arith.constant 0 : index
    %1 = vector.load %arg2[%c0_1, %c0_2] : memref<147x4xbf16, #tpu.memory_space<vmem>>, vector<147x4xbf16>
    %cst = arith.constant dense<0.000000e+00> : vector<1024x4xf32>
    %2 = tpu.matmul %0, %1, %cst {dimension_numbers = #tpu.dot_dimension_numbers<[1], [0], [0], [1], [0, 0, 1, 1], [], []>} : vector<1024x147xbf16>, vector<147x4xbf16>, vector<1024x4xf32> -> vector<1024x4xf32>
    %c0_3 = arith.constant 0 : index
    %c0_4 = arith.constant 0 : index
    %3 = vector.load %arg3[%c0_3, %c0_4] : memref<1x4xf32, #tpu.memory_space<vmem>>, vector<1x4xf32>
    %4 = vector.broadcast %3 : vector<1x4xf32> to vector<1024x4xf32>
    %5 = arith.addf %2, %4 : vector<1024x4xf32>
    %cst_5 = arith.constant 0.000000e+00 : f32
    %6 = vector.broadcast %cst_5 : f32 to vector<1024x4xf32>
    %7 = arith.maximumf %5, %6 : vector<1024x4xf32>
    %c0_6 = arith.constant 0 : index
    %c0_7 = arith.constant 0 : index
    %8 = vector.load %arg4[%c0_6, %c0_7] : memref<1024x4xf32, #tpu.memory_space<vmem>>, vector<1024x4xf32>
    tpu.vector_store %arg4[%c0_6, %c0_7], %7 {strides = array<i32>} : memref<1024x4xf32, #tpu.memory_space<vmem>>, vector<1024x4xf32>,
    return
  }
  func.func @transform_0(%arg0: i32) -> (i32, i32) {
    %c0_i32 = arith.constant 0 : i32
    %c0_i32_0 = arith.constant 0 : i32
    return %arg0, %c0_i32 : i32, i32
  }
  func.func @transform_1(%arg0: i32) -> (i32, i32) {
    %c0_i32 = arith.constant 0 : i32
    %c0_i32_0 = arith.constant 0 : i32
    %c0_i32_1 = arith.constant 0 : i32
    return %c0_i32, %c0_i32_0 : i32, i32
  }
  func.func @transform_2(%arg0: i32) -> (i32, i32) {
    %c0_i32 = arith.constant 0 : i32
    %c0_i32_0 = arith.constant 0 : i32
    %c0_i32_1 = arith.constant 0 : i32
    return %c0_i32, %c0_i32_0 : i32, i32
  }
  func.func @transform_3(%arg0: i32) -> (i32, i32) {
    %c0_i32 = arith.constant 0 : i32
    %c0_i32_0 = arith.constant 0 : i32
    return %arg0, %c0_i32 : i32, i32
  }
}

</mosaic_0001>

<llo_original>
// kernel: tpu_custom_call.1
$region0: #{tpu_custom_call.1}
  #allocation0 [shape = 'u32[]', space=smem, size = 0x4, offset = 0x4, fixed_abs, tag = 'smem constant byte address 0x4 - core index']
  #allocation1 [shape = 'u32[72,128]{1,0:T(1,128)}', space=vmem, size = 0x9000, scoped, tag = 'internal scratch']
  %s0 = inlined_call_operand.vmem [shape: bf16[18432,147], index: 0, kind: input, shape index: {}]
  %s1 = inlined_call_operand.vmem [shape: bf16[147,4], index: 1, kind: input, shape index: {}]
  %s2 = inlined_call_operand.vmem [shape: f32[1,4], index: 2, kind: input, shape index: {}]
  %s3 = inlined_call_operand.vmem [shape: f32[18432,4], index: 3, kind: output, shape index: {}]
  %s4 = sld [smem:[#allocation0]]
  $region45: #{tpu_custom_call.1} parent=0
    _
  %s6 = ssub.s32 1, %s4
  %s7 = scalar_select 0, %s6, %s4
  loop: start=0, step=1, limit=20
  $region2: #{tpu_custom_call.1} parent=0 // loop_pre_header
    _
  $region3: #{tpu_custom_call.1} parent=0 // loop_header
    %s9 = sphi 0, %s13
    %p10 = scmp.ge.s32.totalorder %s9, 20
    %s19 = sphi 0, %s21
    %s22 = sphi 0, %s19
    %s23 = sphi 0, %s22
    %s39 = sphi 0, %s23
    %s43 = sphi 0, %s43
    %s45 = sphi 0, %s43
    %s46 = sphi 0, %s45
    %s60 = sphi 0, %s46
    %s64 = sphi 0, %s64
    %s66 = sphi 0, %s64
    %s67 = sphi 0, %s66
    %s81 = sphi 0, %s67
    %s87 = sphi 0, %s89
    %s90 = sphi 0, %s87
    %s91 = sphi 0, %s90
    %s107 = sphi 0, %s91
  $region4: #{tpu_custom_call.1} parent=0 // loop_header_branch
    %12 = sbr.rel (%p10) target = $region8
  $region5: #{tpu_custom_call.1} parent=0 // loop_body
    %s14 = ssub.s32 %s9, 1
    %s15 = ssub.s32 %s9, 2
    %s16 = sadd.s32 %s9, 1
    %s17 = ssub.s32 %s9, %s16
    %p18 = scmp.eq.s32.totalorder %s17, 0
    %s20 = sadd.s32 %s19, 1
    %s21 = scalar_select %p18, %s19, %s20
    %p24 = pneg %p18
    %p25 = scmp.eq.s32.totalorder %s9, 17
    %p26 = por %p24, %p25
    %p27 = scmp.ne.s32.totalorder %s19, %s22
    %p28 = scmp.eq.s32.totalorder %s9, 0
    %p29 = por %p27, %p28
    %p30 = scmp.ne.s32.totalorder %s19, %s22
    %p31 = scmp.eq.s32.totalorder %s14, 17
    %p32 = por %p30, %p31
    %p33 = scmp.ne.s32.totalorder %s22, %s23
    %p34 = scmp.eq.s32.totalorder %s14, 0
    %p35 = por %p33, %p34
    %p36 = scmp.ne.s32.totalorder %s22, %s23
    %p37 = scmp.eq.s32.totalorder %s15, 17
    %p38 = por %p36, %p37
    %p40 = scmp.ne.s32.totalorder %s23, %s39
    %p41 = scmp.eq.s32.totalorder %s15, 0
    %p42 = por %p40, %p41
    %s44 = sadd.s32 %s43, 1
    %p47 = scmp.eq.s32.totalorder %s9, 17
    %p48 = scmp.ne.s32.totalorder %s43, %s45
    %p49 = scmp.eq.s32.totalorder %s9, 0
    %p50 = por %p48, %p49
    %p51 = scmp.ne.s32.totalorder %s43, %s45
    %p52 = scmp.eq.s32.totalorder %s14, 17
    %p53 = por %p51, %p52
    %p54 = scmp.ne.s32.totalorder %s45, %s46
    %p55 = scmp.eq.s32.totalorder %s14, 0
    %p56 = por %p54, %p55
    %p57 = scmp.ne.s32.totalorder %s45, %s46
    %p58 = scmp.eq.s32.totalorder %s15, 17
    %p59 = por %p57, %p58
    %p61 = scmp.ne.s32.totalorder %s46, %s60
    %p62 = scmp.eq.s32.totalorder %s15, 0
    %p63 = por %p61, %p62
    %s65 = sadd.s32 %s64, 1
    %p68 = scmp.eq.s32.totalorder %s9, 17
    %p69 = scmp.ne.s32.totalorder %s64, %s66
    %p70 = scmp.eq.s32.totalorder %s9, 0
    %p71 = por %p69, %p70
    %p72 = scmp.ne.s32.totalorder %s64, %s66
    %p73 = scmp.eq.s32.totalorder %s14, 17
    %p74 = por %p72, %p73
    %p75 = scmp.ne.s32.totalorder %s66, %s67
    %p76 = scmp.eq.s32.totalorder %s14, 0
    %p77 = por %p75, %p76
    %p78 = scmp.ne.s32.totalorder %s66, %s67
    %p79 = scmp.eq.s32.totalorder %s15, 17
    %p80 = por %p78, %p79
    %p82 = scmp.ne.s32.totalorder %s67, %s81
    %p83 = scmp.eq.s32.totalorder %s15, 0
    %p84 = por %p82, %p83
    %s85 = ssub.s32 %s9, %s16
    %p86 = scmp.eq.s32.totalorder %s85, 0
    %s88 = sadd.s32 %s87, 1
    %s89 = scalar_select %p86, %s87, %s88
    %p92 = pneg %p86
    %p93 = scmp.eq.s32.totalorder %s9, 17
    %p94 = por %p92, %p93
    %p95 = scmp.ne.s32.totalorder %s87, %s90
    %p96 = scmp.eq.s32.totalorder %s9, 0
    %p97 = por %p95, %p96
    %p98 = scmp.ne.s32.totalorder %s87, %s90
    %p99 = scmp.eq.s32.totalorder %s14, 17
    %p100 = por %p98, %p99
    %p101 = scmp.ne.s32.totalorder %s90, %s91
    %p102 = scmp.eq.s32.totalorder %s14, 0
    %p103 = por %p101, %p102
    %p104 = scmp.ne.s32.totalorder %s90, %s91
    %p105 = scmp.eq.s32.totalorder %s15, 17
    %p106 = por %p104, %p105
    %p108 = scmp.ne.s32.totalorder %s91, %s107
    %p109 = scmp.eq.s32.totalorder %s15, 0
    %p110 = por %p108, %p109
    %p111 = scmp.le.s32.totalorder 1, %s9
    %p112 = scmp.lt.s32.totalorder %s9, 19
    %p113 = pnand %p111, %p112
    %p114 = pneg %p113
    // Predicated region
    $region9: #{tpu_custom_call.1} parent=5 // pred_check
      _
    $region10: #{tpu_custom_call.1} parent=5 // pred_check_branch
      %116 = sbr.rel (%p113) target = $region12
    $region11: #{tpu_custom_call.1} parent=5 // pred_region
      %s117 = ssub.s32 %s9, 1
      // Predicated region
      $region13: #{tpu_custom_call.1} parent=11 // pred_check
        %p118 = pneg %p56
      $region14: #{tpu_custom_call.1} parent=11 // pred_check_branch
        %120 = sbr.rel (%p118) target = $region16
      $region15: #{tpu_custom_call.1} parent=11 // pred_region
        _
      $region16: #{tpu_custom_call.1} parent=11 // pred_fallthru
        _
      // Predicated region
      $region17: #{tpu_custom_call.1} parent=11 // pred_check
        %p121 = pneg %p77
      $region18: #{tpu_custom_call.1} parent=11 // pred_check_branch
        %123 = sbr.rel (%p121) target = $region20
      $region19: #{tpu_custom_call.1} parent=11 // pred_region
        _
      $region20: #{tpu_custom_call.1} parent=11 // pred_fallthru
        _
    $region12: #{tpu_custom_call.1} parent=5 // pred_fallthru
      _
    %p124 = scmp.lt.s32.totalorder %s9, 18
    // Predicated region
    $region21: #{tpu_custom_call.1} parent=5 // pred_check
      %p125 = pneg %p124
    $region22: #{tpu_custom_call.1} parent=5 // pred_check_branch
      %127 = sbr.rel (%p125) target = $region24
    $region23: #{tpu_custom_call.1} parent=5 // pred_region
      // Predicated region
      $region25: #{tpu_custom_call.1} parent=23 // pred_check
        %p128 = pneg %p29
      $region26: #{tpu_custom_call.1} parent=23 // pred_check_branch
        %130 = sbr.rel (%p128) target = $region28
      $region27: #{tpu_custom_call.1} parent=23 // pred_region
        %s131 = smul.u32 128, %s9
        %p132 = scmp.lt.s32.totalorder %s131, 2303
        %s133 = scalar_select %p132, %s131, 2303
        %s134 = smul.addr %s133, 2
        %s135 = smul.addr %s134, 4
        %s136 = scalar_lea.vmem %s0, %s135
        %s137 = smul.u32 128, %s9
      $region28: #{tpu_custom_call.1} parent=23 // pred_fallthru
        _
    $region24: #{tpu_custom_call.1} parent=5 // pred_fallthru
      _
    %p138 = scmp.le.s32.totalorder 1, %s9
    %p139 = scmp.lt.s32.totalorder %s9, 19
    %p140 = pnand %p138, %p139
    %p141 = pneg %p140
    // Predicated region
    $region29: #{tpu_custom_call.1} parent=5 // pred_check
      _
    $region30: #{tpu_custom_call.1} parent=5 // pred_check_branch
      %143 = sbr.rel (%p140) target = $region32
    $region31: #{tpu_custom_call.1} parent=5 // pred_region
      %s144 = ssub.s32 %s9, 1
      %s145 = smul.u32 128, %s14
      %p146 = scmp.lt.s32.totalorder %s145, 2303
      %s147 = scalar_select %p146, %s145, 2303
      %s148 = smul.addr %s147, 2
      %s149 = smul.addr %s148, 4
      %s150 = scalar_lea.vmem %s0, %s149
      %p151 = pneg %p35
      %p152 = pneg %p32
      %p153 = pneg %p56
      %p154 = pneg %p53
      %p155 = pneg %p77
      %p156 = pneg %p74
      %p157 = pneg %p103
      %p158 = pneg %p100
      %s159 = smul.u32 128, %s14
      %p160 = scmp.lt.s32.totalorder %s159, 2303
      %s161 = scalar_select %p160, %s159, 2303
      %s162 = smul.addr %s161, 8
      %s163 = scalar_lea.vmem %s3, %s162
      %s164 = smul.u32 128, %s14
      %p165 = scmp.lt.s32.totalorder %s164, 2303
      %s166 = scalar_select %p165, %s164, 2303
      %s167 = smul.addr %s166, 2
      %s168 = smul.addr %s167, 4
      %s169 = scalar_lea.vmem %s0, %s168
      %s170 = smul.u32 128, %s14
      %s171 = smul.u32 128, %s14
      %p172 = scmp.lt.s32.totalorder %s171, 2303
      %s173 = scalar_select %p172, %s171, 2303
      %s174 = smul.addr %s173, 8
      %s175 = scalar_lea.vmem %s3, %s174
      %s176 = smul.u32 128, %s14
      %v178 = vld [vmem:[%s169] sm:$0xff]
      %v179 = vld [vmem:[%s169 + $0x8] sm:$0xff]
      %v180 = vld [vmem:[%s169 + $0x10] sm:$0xff]
      %v181 = vld [vmem:[%s169 + $0x18] sm:$0xff]
      %v182 = vld [vmem:[%s169 + $0x20] sm:$0xff]
      %v183 = vld [vmem:[%s169 + $0x28] sm:$0xff]
      %v184 = vld [vmem:[%s169 + $0x30] sm:$0xff]
      %v185 = vld [vmem:[%s169 + $0x38] sm:$0xff]
      %v186 = vld [vmem:[%s169 + $0x40] sm:$0xff]
      %v187 = vld [vmem:[%s169 + $0x48] sm:$0xff]
      %v188 = vld [vmem:[%s169 + $0x50] sm:$0xff]
      %v189 = vld [vmem:[%s169 + $0x58] sm:$0xff]
      %v190 = vld [vmem:[%s169 + $0x60] sm:$0xff]
      %v191 = vld [vmem:[%s169 + $0x68] sm:$0xff]
      %v192 = vld [vmem:[%s169 + $0x70] sm:$0xff]
      %v193 = vld [vmem:[%s169 + $0x78] sm:$0xff]
      %v194 = vld [vmem:[%s169 + $0x80] sm:$0xff]
      %v195 = vld [vmem:[%s169 + $0x88] sm:$0xff]
      %v196 = vld [vmem:[%s169 + $0x90] sm:$0xff]
      %v197 = vld [vmem:[%s169 + $0x98] sm:$0xff]
      %v198 = vld [vmem:[%s169 + $0xa0] sm:$0xff]
      %v199 = vld [vmem:[%s169 + $0xa8] sm:$0xff]
      %v200 = vld [vmem:[%s169 + $0xb0] sm:$0xff]
      %v201 = vld [vmem:[%s169 + $0xb8] sm:$0xff]
      %v202 = vld [vmem:[%s169 + $0xc0] sm:$0xff]
      %v203 = vld [vmem:[%s169 + $0xc8] sm:$0xff]
      %v204 = vld [vmem:[%s169 + $0xd0] sm:$0xff]
      %v205 = vld [vmem:[%s169 + $0xd8] sm:$0xff]
      %v206 = vld [vmem:[%s169 + $0xe0] sm:$0xff]
      %v207 = vld [vmem:[%s169 + $0xe8] sm:$0xff]
      %v208 = vld [vmem:[%s169 + $0xf0] sm:$0xff]
      %v209 = vld [vmem:[%s169 + $0xf8] sm:$0xff]
      %v210 = vld [vmem:[%s169 + $0x100] sm:$0xff]
      %v211 = vld [vmem:[%s169 + $0x108] sm:$0xff]
      %v212 = vld [vmem:[%s169 + $0x110] sm:$0xff]
      %v213 = vld [vmem:[%s169 + $0x118] sm:$0xff]
      %v214 = vld [vmem:[%s169 + $0x120] sm:$0xff]
      %v215 = vld [vmem:[%s169 + $0x128] sm:$0xff]
      %v216 = vld [vmem:[%s169 + $0x130] sm:$0xff]
      %v217 = vld [vmem:[%s169 + $0x138] sm:$0xff]
      %v218 = vld [vmem:[%s169 + $0x140] sm:$0xff]
      %v219 = vld [vmem:[%s169 + $0x148] sm:$0xff]
      %v220 = vld [vmem:[%s169 + $0x150] sm:$0xff]
      %v221 = vld [vmem:[%s169 + $0x158] sm:$0xff]
      %v222 = vld [vmem:[%s169 + $0x160] sm:$0xff]
      %v223 = vld [vmem:[%s169 + $0x168] sm:$0xff]
      %v224 = vld [vmem:[%s169 + $0x170] sm:$0xff]
      %v225 = vld [vmem:[%s169 + $0x178] sm:$0xff]
      %v226 = vld [vmem:[%s169 + $0x180] sm:$0xff]
      %v227 = vld [vmem:[%s169 + $0x188] sm:$0xff]
      %v228 = vld [vmem:[%s169 + $0x190] sm:$0xff]
      %v229 = vld [vmem:[%s169 + $0x198] sm:$0xff]
      %v230 = vld [vmem:[%s169 + $0x1a0] sm:$0xff]
      %v231 = vld [vmem:[%s169 + $0x1a8] sm:$0xff]
      %v232 = vld [vmem:[%s169 + $0x1b0] sm:$0xff]
      %v233 = vld [vmem:[%s169 + $0x1b8] sm:$0xff]
      %v234 = vld [vmem:[%s169 + $0x1c0] sm:$0xff]
      %v235 = vld [vmem:[%s169 + $0x1c8] sm:$0xff]
      %v236 = vld [vmem:[%s169 + $0x1d0] sm:$0xff]
      %v237 = vld [vmem:[%s169 + $0x1d8] sm:$0xff]
      %v238 = vld [vmem:[%s169 + $0x1e0] sm:$0xff]
      %v239 = vld [vmem:[%s169 + $0x1e8] sm:$0xff]
      %v240 = vld [vmem:[%s169 + $0x1f0] sm:$0xff]
      %v241 = vld [vmem:[%s169 + $0x1f8] sm:$0xff]
      %v242 = vld [vmem:[%s169 + $0x200] sm:$0xff]
      %v243 = vld [vmem:[%s169 + $0x208] sm:$0xff]
      %v244 = vld [vmem:[%s169 + $0x210] sm:$0xff]
      %v245 = vld [vmem:[%s169 + $0x218] sm:$0xff]
      %v246 = vld [vmem:[%s169 + $0x220] sm:$0xff]
      %v247 = vld [vmem:[%s169 + $0x228] sm:$0xff]
      %v248 = vld [vmem:[%s169 + $0x230] sm:$0xff]
      %v249 = vld [vmem:[%s169 + $0x238] sm:$0xff]
      %v250 = vld [vmem:[%s169 + $0x240] sm:$0xff]
      %v251 = vld [vmem:[%s169 + $0x248] sm:$0xff]
      %v252 = vld [vmem:[%s169 + $0x250] sm:$0xff]
      %v253 = vld [vmem:[%s169 + $0x258] sm:$0xff]
      %v254 = vld [vmem:[%s169 + $0x260] sm:$0xff]
      %v255 = vld [vmem:[%s169 + $0x268] sm:$0xff]
      %v256 = vld [vmem:[%s169 + $0x270] sm:$0xff]
      %v257 = vld [vmem:[%s169 + $0x278] sm:$0xff]
      %v258 = vld [vmem:[%s169 + $0x280] sm:$0xff]
      %v259 = vld [vmem:[%s169 + $0x288] sm:$0xff]
      %v260 = vld [vmem:[%s169 + $0x290] sm:$0xff]
      %v261 = vld [vmem:[%s169 + $0x298] sm:$0xff]
      %v262 = vld [vmem:[%s169 + $0x2a0] sm:$0xff]
      %v263 = vld [vmem:[%s169 + $0x2a8] sm:$0xff]
      %v264 = vld [vmem:[%s169 + $0x2b0] sm:$0xff]
      %v265 = vld [vmem:[%s169 + $0x2b8] sm:$0xff]
      %v266 = vld [vmem:[%s169 + $0x2c0] sm:$0xff]
      %v267 = vld [vmem:[%s169 + $0x2c8] sm:$0xff]
      %v268 = vld [vmem:[%s169 + $0x2d0] sm:$0xff]
      %v269 = vld [vmem:[%s169 + $0x2d8] sm:$0xff]
      %v270 = vld [vmem:[%s169 + $0x2e0] sm:$0xff]
      %v271 = vld [vmem:[%s169 + $0x2e8] sm:$0xff]
      %v272 = vld [vmem:[%s169 + $0x2f0] sm:$0xff]
      %v273 = vld [vmem:[%s169 + $0x2f8] sm:$0xff]
      %v274 = vld [vmem:[%s169 + $0x300] sm:$0xff]
      %v275 = vld [vmem:[%s169 + $0x308] sm:$0xff]
      %v276 = vld [vmem:[%s169 + $0x310] sm:$0xff]
      %v277 = vld [vmem:[%s169 + $0x318] sm:$0xff]
      %v278 = vld [vmem:[%s169 + $0x320] sm:$0xff]
      %v279 = vld [vmem:[%s169 + $0x328] sm:$0xff]
      %v280 = vld [vmem:[%s169 + $0x330] sm:$0xff]
      %v281 = vld [vmem:[%s169 + $0x338] sm:$0xff]
      %v282 = vld [vmem:[%s169 + $0x340] sm:$0xff]
      %v283 = vld [vmem:[%s169 + $0x348] sm:$0xff]
      %v284 = vld [vmem:[%s169 + $0x350] sm:$0xff]
      %v285 = vld [vmem:[%s169 + $0x358] sm:$0xff]
      %v286 = vld [vmem:[%s169 + $0x360] sm:$0xff]
      %v287 = vld [vmem:[%s169 + $0x368] sm:$0xff]
      %v288 = vld [vmem:[%s169 + $0x370] sm:$0xff]
      %v289 = vld [vmem:[%s169 + $0x378] sm:$0xff]
      %v290 = vld [vmem:[%s169 + $0x380] sm:$0xff]
      %v291 = vld [vmem:[%s169 + $0x388] sm:$0xff]
      %v292 = vld [vmem:[%s169 + $0x390] sm:$0xff]
      %v293 = vld [vmem:[%s169 + $0x398] sm:$0xff]
      %v294 = vld [vmem:[%s169 + $0x3a0] sm:$0xff]
      %v295 = vld [vmem:[%s169 + $0x3a8] sm:$0xff]
      %v296 = vld [vmem:[%s169 + $0x3b0] sm:$0xff]
      %v297 = vld [vmem:[%s169 + $0x3b8] sm:$0xff]
      %v298 = vld [vmem:[%s169 + $0x3c0] sm:$0xff]
      %v299 = vld [vmem:[%s169 + $0x3c8] sm:$0xff]
      %v300 = vld [vmem:[%s169 + $0x3d0] sm:$0xff]
      %v301 = vld [vmem:[%s169 + $0x3d8] sm:$0xff]
      %v302 = vld [vmem:[%s169 + $0x3e0] sm:$0xff]
      %v303 = vld [vmem:[%s169 + $0x3e8] sm:$0xff]
      %v304 = vld [vmem:[%s169 + $0x3f0] sm:$0xff]
      %v305 = vld [vmem:[%s169 + $0x3f8] sm:$0xff]
      %v306 = vld [vmem:[%s1] sm:$0xf]
      %v307 = vld [vmem:[%s1 + $0x4] sm:$0xf]
      %v308 = vld [vmem:[%s1 + $0x8] sm:$0xf]
      %v309 = vld [vmem:[%s1 + $0xc] sm:$0xf]
      %v310 = vld [vmem:[%s1 + $0x10] sm:$0xf]
      %v311 = vld [vmem:[%s1 + $0x14] sm:$0xf]
      %v312 = vld [vmem:[%s1 + $0x18] sm:$0xf]
      %v313 = vld [vmem:[%s1 + $0x1c] sm:$0xf]
      %v314 = vld [vmem:[%s1 + $0x20] sm:$0xf]
      %v315 = vld [vmem:[%s1 + $0x24] sm:$0xf]
      %v316 = vld [vmem:[%s1 + $0x28] sm:$0xf]
      %v317 = vld [vmem:[%s1 + $0x2c] sm:$0xf]
      %v318 = vld [vmem:[%s1 + $0x30] sm:$0xf]
      %v319 = vld [vmem:[%s1 + $0x34] sm:$0xf]
      %v320 = vld [vmem:[%s1 + $0x38] sm:$0xf]
      %v321 = vld [vmem:[%s1 + $0x3c] sm:$0xf]
      %v322 = vld [vmem:[%s1 + $0x40] sm:$0xf]
      %v323 = vld [vmem:[%s1 + $0x44] sm:$0xf]
      %v324 = vld [vmem:[%s1 + $0x48] sm:$0x3]
      %v325 = vld [vmem:[%s2] sm:$0x1]
      %v327 = vperm.slane %v325, 0
      %v457 = vunpack.c.l.b16 %v178
      %v458 = vunpack.c.h.b16 %v178
      %v459 = vunpack.c.l.b16 %v179
      %v460 = vunpack.c.h.b16 %v179
      %v461 = vunpack.c.l.b16 %v180
      %v462 = vunpack.c.h.b16 %v180
      %v463 = vunpack.c.l.b16 %v181
      %v464 = vunpack.c.h.b16 %v181
      %v465 = vunpack.c.l.b16 %v182
      %v466 = vunpack.c.h.b16 %v182
      %v467 = vunpack.c.l.b16 %v183
      %v468 = vunpack.c.h.b16 %v183
      %v469 = vunpack.c.l.b16 %v184
      %v470 = vunpack.c.h.b16 %v184
      %v471 = vunpack.c.l.b16 %v185
      %v472 = vunpack.c.h.b16 %v185
      %v473 = vunpack.c.l.b16 %v186
      %v474 = vunpack.c.h.b16 %v186
      %v475 = vunpack.c.l.b16 %v187
      %v476 = vunpack.c.h.b16 %v187
      %v477 = vunpack.c.l.b16 %v188
      %v478 = vunpack.c.h.b16 %v188
      %v479 = vunpack.c.l.b16 %v189
      %v480 = vunpack.c.h.b16 %v189
      %v481 = vunpack.c.l.b16 %v190
      %v482 = vunpack.c.h.b16 %v190
      %v483 = vunpack.c.l.b16 %v191
      %v484 = vunpack.c.h.b16 %v191
      %v485 = vunpack.c.l.b16 %v192
      %v486 = vunpack.c.h.b16 %v192
      %v487 = vunpack.c.l.b16 %v193
      %v488 = vunpack.c.h.b16 %v193
      %v489 = vunpack.c.l.b16 %v194
      %v490 = vunpack.c.h.b16 %v194
      %v491 = vunpack.c.l.b16 %v195
      %v492 = vunpack.c.h.b16 %v195
      %v493 = vunpack.c.l.b16 %v196
      %v494 = vunpack.c.h.b16 %v196
      %v495 = vunpack.c.l.b16 %v197
      %v496 = vunpack.c.h.b16 %v197
      %v497 = vunpack.c.l.b16 %v198
      %v498 = vunpack.c.h.b16 %v198
      %v499 = vunpack.c.l.b16 %v199
      %v500 = vunpack.c.h.b16 %v199
      %v501 = vunpack.c.l.b16 %v200
      %v502 = vunpack.c.h.b16 %v200
      %v503 = vunpack.c.l.b16 %v201
      %v504 = vunpack.c.h.b16 %v201
      %v505 = vunpack.c.l.b16 %v202
      %v506 = vunpack.c.h.b16 %v202
      %v507 = vunpack.c.l.b16 %v203
      %v508 = vunpack.c.h.b16 %v203
      %v509 = vunpack.c.l.b16 %v204
      %v510 = vunpack.c.h.b16 %v204
      %v511 = vunpack.c.l.b16 %v205
      %v512 = vunpack.c.h.b16 %v205
      %v513 = vunpack.c.l.b16 %v206
      %v514 = vunpack.c.h.b16 %v206
      %v515 = vunpack.c.l.b16 %v207
      %v516 = vunpack.c.h.b16 %v207
      %v517 = vunpack.c.l.b16 %v208
      %v518 = vunpack.c.h.b16 %v208
      %v519 = vunpack.c.l.b16 %v209
      %v520 = vunpack.c.h.b16 %v209
      %v521 = vunpack.c.l.b16 %v210
      %v522 = vunpack.c.h.b16 %v210
      %v523 = vunpack.c.l.b16 %v211
      %v524 = vunpack.c.h.b16 %v211
      %v525 = vunpack.c.l.b16 %v212
      %v526 = vunpack.c.h.b16 %v212
      %v527 = vunpack.c.l.b16 %v213
      %v528 = vunpack.c.h.b16 %v213
      %v529 = vunpack.c.l.b16 %v214
      %v530 = vunpack.c.h.b16 %v214
      %v531 = vunpack.c.l.b16 %v215
      %v532 = vunpack.c.h.b16 %v215
      %v533 = vunpack.c.l.b16 %v216
      %v534 = vunpack.c.h.b16 %v216
      %v535 = vunpack.c.l.b16 %v217
      %v536 = vunpack.c.h.b16 %v217
      %v537 = vunpack.c.l.b16 %v218
      %v538 = vunpack.c.h.b16 %v218
      %v539 = vunpack.c.l.b16 %v219
      %v540 = vunpack.c.h.b16 %v219
      %v541 = vunpack.c.l.b16 %v220
      %v542 = vunpack.c.h.b16 %v220
      %v543 = vunpack.c.l.b16 %v221
      %v544 = vunpack.c.h.b16 %v221
      %v545 = vunpack.c.l.b16 %v222
      %v546 = vunpack.c.h.b16 %v222
      %v547 = vunpack.c.l.b16 %v223
      %v548 = vunpack.c.h.b16 %v223
      %v549 = vunpack.c.l.b16 %v224
      %v550 = vunpack.c.h.b16 %v224
      %v551 = vunpack.c.l.b16 %v225
      %v552 = vunpack.c.h.b16 %v225
      %v553 = vunpack.c.l.b16 %v226
      %v554 = vunpack.c.h.b16 %v226
      %v555 = vunpack.c.l.b16 %v227
      %v556 = vunpack.c.h.b16 %v227
      %v557 = vunpack.c.l.b16 %v228
      %v558 = vunpack.c.h.b16 %v228
      %v559 = vunpack.c.l.b16 %v229
      %v560 = vunpack.c.h.b16 %v229
      %v561 = vunpack.c.l.b16 %v230
      %v562 = vunpack.c.h.b16 %v230
      %v563 = vunpack.c.l.b16 %v231
      %v564 = vunpack.c.h.b16 %v231
      %v565 = vunpack.c.l.b16 %v232
      %v566 = vunpack.c.h.b16 %v232
      %v567 = vunpack.c.l.b16 %v233
      %v568 = vunpack.c.h.b16 %v233
      %v569 = vunpack.c.l.b16 %v234
      %v570 = vunpack.c.h.b16 %v234
      %v571 = vunpack.c.l.b16 %v235
      %v572 = vunpack.c.h.b16 %v235
      %v573 = vunpack.c.l.b16 %v236
      %v574 = vunpack.c.h.b16 %v236
      %v575 = vunpack.c.l.b16 %v237
      %v576 = vunpack.c.h.b16 %v237
      %v577 = vunpack.c.l.b16 %v238
      %v578 = vunpack.c.h.b16 %v238
      %v579 = vunpack.c.l.b16 %v239
      %v580 = vunpack.c.h.b16 %v239
      %v581 = vunpack.c.l.b16 %v240
      %v582 = vunpack.c.h.b16 %v240
      %v583 = vunpack.c.l.b16 %v241
      %v584 = vunpack.c.h.b16 %v241
      %v585 = vunpack.c.l.b16 %v242
      %v586 = vunpack.c.h.b16 %v242
      %v587 = vunpack.c.l.b16 %v243
      %v588 = vunpack.c.h.b16 %v243
      %v589 = vunpack.c.l.b16 %v244
      %v590 = vunpack.c.h.b16 %v244
      %v591 = vunpack.c.l.b16 %v245
      %v592 = vunpack.c.h.b16 %v245
      %v593 = vunpack.c.l.b16 %v246
      %v594 = vunpack.c.h.b16 %v246
      %v595 = vunpack.c.l.b16 %v247
      %v596 = vunpack.c.h.b16 %v247
      %v597 = vunpack.c.l.b16 %v248
      %v598 = vunpack.c.h.b16 %v248
      %v599 = vunpack.c.l.b16 %v249
      %v600 = vunpack.c.h.b16 %v249
      %v601 = vunpack.c.l.b16 %v250
      %v602 = vunpack.c.h.b16 %v250
      %v603 = vunpack.c.l.b16 %v251
      %v604 = vunpack.c.h.b16 %v251
      %v605 = vunpack.c.l.b16 %v252
      %v606 = vunpack.c.h.b16 %v252
      %v607 = vunpack.c.l.b16 %v253
      %v608 = vunpack.c.h.b16 %v253
      %v609 = vunpack.c.l.b16 %v254
      %v610 = vunpack.c.h.b16 %v254
      %v611 = vunpack.c.l.b16 %v255
      %v612 = vunpack.c.h.b16 %v255
      %v613 = vunpack.c.l.b16 %v256
      %v614 = vunpack.c.h.b16 %v256
      %v615 = vunpack.c.l.b16 %v257
      %v616 = vunpack.c.h.b16 %v257
      %v617 = vunpack.c.l.b16 %v258
      %v618 = vunpack.c.h.b16 %v258
      %v619 = vunpack.c.l.b16 %v259
      %v620 = vunpack.c.h.b16 %v259
      %v621 = vunpack.c.l.b16 %v260
      %v622 = vunpack.c.h.b16 %v260
      %v623 = vunpack.c.l.b16 %v261
      %v624 = vunpack.c.h.b16 %v261
      %v625 = vunpack.c.l.b16 %v262
      %v626 = vunpack.c.h.b16 %v262
      %v627 = vunpack.c.l.b16 %v263
      %v628 = vunpack.c.h.b16 %v263
      %v629 = vunpack.c.l.b16 %v264
      %v630 = vunpack.c.h.b16 %v264
      %v631 = vunpack.c.l.b16 %v265
      %v632 = vunpack.c.h.b16 %v265
      %v633 = vunpack.c.l.b16 %v266
      %v634 = vunpack.c.h.b16 %v266
      %v635 = vunpack.c.l.b16 %v267
      %v636 = vunpack.c.h.b16 %v267
      %v637 = vunpack.c.l.b16 %v268
      %v638 = vunpack.c.h.b16 %v268
      %v639 = vunpack.c.l.b16 %v269
      %v640 = vunpack.c.h.b16 %v269
      %v641 = vunpack.c.l.b16 %v270
      %v642 = vunpack.c.h.b16 %v270
      %v643 = vunpack.c.l.b16 %v271
      %v644 = vunpack.c.h.b16 %v271
      %v645 = vunpack.c.l.b16 %v272
      %v646 = vunpack.c.h.b16 %v272
      %v647 = vunpack.c.l.b16 %v273
      %v648 = vunpack.c.h.b16 %v273
      %v649 = vunpack.c.l.b16 %v274
      %v650 = vunpack.c.h.b16 %v274
      %v651 = vunpack.c.l.b16 %v275
      %v652 = vunpack.c.h.b16 %v275
      %v653 = vunpack.c.l.b16 %v276
      %v654 = vunpack.c.h.b16 %v276
      %v655 = vunpack.c.l.b16 %v277
      %v656 = vunpack.c.h.b16 %v277
      %v657 = vunpack.c.l.b16 %v278
      %v658 = vunpack.c.h.b16 %v278
      %v659 = vunpack.c.l.b16 %v279
      %v660 = vunpack.c.h.b16 %v279
      %v661 = vunpack.c.l.b16 %v280
      %v662 = vunpack.c.h.b16 %v280
      %v663 = vunpack.c.l.b16 %v281
      %v664 = vunpack.c.h.b16 %v281
      %v665 = vunpack.c.l.b16 %v282
      %v666 = vunpack.c.h.b16 %v282
      %v667 = vunpack.c.l.b16 %v283
      %v668 = vunpack.c.h.b16 %v283
      %v669 = vunpack.c.l.b16 %v284
      %v670 = vunpack.c.h.b16 %v284
      %v671 = vunpack.c.l.b16 %v285
      %v672 = vunpack.c.h.b16 %v285
      %v673 = vunpack.c.l.b16 %v286
      %v674 = vunpack.c.h.b16 %v286
      %v675 = vunpack.c.l.b16 %v287
      %v676 = vunpack.c.h.b16 %v287
      %v677 = vunpack.c.l.b16 %v288
      %v678 = vunpack.c.h.b16 %v288
      %v679 = vunpack.c.l.b16 %v289
      %v680 = vunpack.c.h.b16 %v289
      %v681 = vunpack.c.l.b16 %v290
      %v682 = vunpack.c.h.b16 %v290
      %v683 = vunpack.c.l.b16 %v291
      %v684 = vunpack.c.h.b16 %v291
      %v685 = vunpack.c.l.b16 %v292
      %v686 = vunpack.c.h.b16 %v292
      %v687 = vunpack.c.l.b16 %v293
      %v688 = vunpack.c.h.b16 %v293
      %v689 = vunpack.c.l.b16 %v294
      %v690 = vunpack.c.h.b16 %v294
      %v691 = vunpack.c.l.b16 %v295
      %v692 = vunpack.c.h.b16 %v295
      %v693 = vunpack.c.l.b16 %v296
      %v694 = vunpack.c.h.b16 %v296
      %v695 = vunpack.c.l.b16 %v297
      %v696 = vunpack.c.h.b16 %v297
      %v697 = vunpack.c.l.b16 %v298
      %v698 = vunpack.c.h.b16 %v298
      %v699 = vunpack.c.l.b16 %v299
      %v700 = vunpack.c.h.b16 %v299
      %v701 = vunpack.c.l.b16 %v300
      %v702 = vunpack.c.h.b16 %v300
      %v703 = vunpack.c.l.b16 %v301
      %v704 = vunpack.c.h.b16 %v301
      %v705 = vunpack.c.l.b16 %v302
      %v706 = vunpack.c.h.b16 %v302
      %v707 = vunpack.c.l.b16 %v303
      %v708 = vunpack.c.h.b16 %v303
      %v709 = vunpack.c.l.b16 %v304
      %v710 = vunpack.c.h.b16 %v304
      %v711 = vunpack.c.l.b16 %v305
      %v712 = vunpack.c.h.b16 %v305
      %v713 = vpack.c.b16 %v459, %v457
      %v714 = vpack.c.b16 %v460, %v458
      %v715 = vpack.c.b16 %v463, %v461
      %v716 = vpack.c.b16 %v464, %v462
      %v717 = vpack.c.b16 %v467, %v465
      %v718 = vpack.c.b16 %v468, %v466
      %v719 = vpack.c.b16 %v471, %v469
      %v720 = vpack.c.b16 %v472, %v470
      %v721 = vpack.c.b16 %v475, %v473
      %v722 = vpack.c.b16 %v476, %v474
      %v723 = vpack.c.b16 %v479, %v477
      %v724 = vpack.c.b16 %v480, %v478
      %v725 = vpack.c.b16 %v483, %v481
      %v726 = vpack.c.b16 %v484, %v482
      %v727 = vpack.c.b16 %v487, %v485
      %v728 = vpack.c.b16 %v488, %v486
      %v729 = vpack.c.b16 %v491, %v489
      %v730 = vpack.c.b16 %v492, %v490
      %v731 = vpack.c.b16 %v495, %v493
      %v732 = vpack.c.b16 %v496, %v494
      %v733 = vpack.c.b16 %v499, %v497
      %v734 = vpack.c.b16 %v500, %v498
      %v735 = vpack.c.b16 %v503, %v501
      %v736 = vpack.c.b16 %v504, %v502
      %v737 = vpack.c.b16 %v507, %v505
      %v738 = vpack.c.b16 %v508, %v506
      %v739 = vpack.c.b16 %v511, %v509
      %v740 = vpack.c.b16 %v512, %v510
      %v741 = vpack.c.b16 %v515, %v513
      %v742 = vpack.c.b16 %v516, %v514
      %v743 = vpack.c.b16 %v519, %v517
      %v744 = vpack.c.b16 %v520, %v518
      %v745 = vpack.c.b16 %v523, %v521
      %v746 = vpack.c.b16 %v524, %v522
      %v747 = vpack.c.b16 %v527, %v525
      %v748 = vpack.c.b16 %v528, %v526
      %v749 = vpack.c.b16 %v531, %v529
      %v750 = vpack.c.b16 %v532, %v530
      %v751 = vpack.c.b16 %v535, %v533
      %v752 = vpack.c.b16 %v536, %v534
      %v753 = vpack.c.b16 %v539, %v537
      %v754 = vpack.c.b16 %v540, %v538
      %v755 = vpack.c.b16 %v543, %v541
      %v756 = vpack.c.b16 %v544, %v542
      %v757 = vpack.c.b16 %v547, %v545
      %v758 = vpack.c.b16 %v548, %v546
      %v759 = vpack.c.b16 %v551, %v549
      %v760 = vpack.c.b16 %v552, %v550
      %v761 = vpack.c.b16 %v555, %v553
      %v762 = vpack.c.b16 %v556, %v554
      %v763 = vpack.c.b16 %v559, %v557
      %v764 = vpack.c.b16 %v560, %v558
      %v765 = vpack.c.b16 %v563, %v561
      %v766 = vpack.c.b16 %v564, %v562
      %v767 = vpack.c.b16 %v567, %v565
      %v768 = vpack.c.b16 %v568, %v566
      %v769 = vpack.c.b16 %v571, %v569
      %v770 = vpack.c.b16 %v572, %v570
      %v771 = vpack.c.b16 %v575, %v573
      %v772 = vpack.c.b16 %v576, %v574
      %v773 = vpack.c.b16 %v579, %v577
      %v774 = vpack.c.b16 %v580, %v578
      %v775 = vpack.c.b16 %v583, %v581
      %v776 = vpack.c.b16 %v584, %v582
      %v777 = vpack.c.b16 %v587, %v585
      %v778 = vpack.c.b16 %v588, %v586
      %v779 = vpack.c.b16 %v591, %v589
      %v780 = vpack.c.b16 %v592, %v590
      %v781 = vpack.c.b16 %v595, %v593
      %v782 = vpack.c.b16 %v596, %v594
      %v783 = vpack.c.b16 %v599, %v597
      %v784 = vpack.c.b16 %v600, %v598
      %v785 = vpack.c.b16 %v603, %v601
      %v786 = vpack.c.b16 %v604, %v602
      %v787 = vpack.c.b16 %v607, %v605
      %v788 = vpack.c.b16 %v608, %v606
      %v789 = vpack.c.b16 %v611, %v609
      %v790 = vpack.c.b16 %v612, %v610
      %v791 = vpack.c.b16 %v615, %v613
      %v792 = vpack.c.b16 %v616, %v614
      %v793 = vpack.c.b16 %v619, %v617
      %v794 = vpack.c.b16 %v620, %v618
      %v795 = vpack.c.b16 %v623, %v621
      %v796 = vpack.c.b16 %v624, %v622
      %v797 = vpack.c.b16 %v627, %v625
      %v798 = vpack.c.b16 %v628, %v626
      %v799 = vpack.c.b16 %v631, %v629
      %v800 = vpack.c.b16 %v632, %v630
      %v801 = vpack.c.b16 %v635, %v633
      %v802 = vpack.c.b16 %v636, %v634
      %v803 = vpack.c.b16 %v639, %v637
      %v804 = vpack.c.b16 %v640, %v638
      %v805 = vpack.c.b16 %v643, %v641
      %v806 = vpack.c.b16 %v644, %v642
      %v807 = vpack.c.b16 %v647, %v645
      %v808 = vpack.c.b16 %v648, %v646
      %v809 = vpack.c.b16 %v651, %v649
      %v810 = vpack.c.b16 %v652, %v650
      %v811 = vpack.c.b16 %v655, %v653
      %v812 = vpack.c.b16 %v656, %v654
      %v813 = vpack.c.b16 %v659, %v657
      %v814 = vpack.c.b16 %v660, %v658
      %v815 = vpack.c.b16 %v663, %v661
      %v816 = vpack.c.b16 %v664, %v662
      %v817 = vpack.c.b16 %v667, %v665
      %v818 = vpack.c.b16 %v668, %v666
      %v819 = vpack.c.b16 %v671, %v669
      %v820 = vpack.c.b16 %v672, %v670
      %v821 = vpack.c.b16 %v675, %v673
      %v822 = vpack.c.b16 %v676, %v674
      %v823 = vpack.c.b16 %v679, %v677
      %v824 = vpack.c.b16 %v680, %v678
      %v825 = vpack.c.b16 %v683, %v681
      %v826 = vpack.c.b16 %v684, %v682
      %v827 = vpack.c.b16 %v687, %v685
      %v828 = vpack.c.b16 %v688, %v686
      %v829 = vpack.c.b16 %v691, %v689
      %v830 = vpack.c.b16 %v692, %v690
      %v831 = vpack.c.b16 %v695, %v693
      %v832 = vpack.c.b16 %v696, %v694
      %v833 = vpack.c.b16 %v699, %v697
      %v834 = vpack.c.b16 %v700, %v698
      %v835 = vpack.c.b16 %v703, %v701
      %v836 = vpack.c.b16 %v704, %v702
      %v837 = vpack.c.b16 %v707, %v705
      %v838 = vpack.c.b16 %v708, %v706
      %v839 = vpack.c.b16 %v711, %v709
      %v840 = vpack.c.b16 %v712, %v710
      %v924 = vunpack.c.l.b16 %v306
      %v925 = vunpack.c.l.b16 %v307
      %v926 = vunpack.c.l.b16 %v308
      %v927 = vunpack.c.l.b16 %v309
      %v928 = vunpack.c.l.b16 %v310
      %v929 = vunpack.c.l.b16 %v311
      %v930 = vunpack.c.l.b16 %v312
      %v931 = vunpack.c.l.b16 %v313
      %v932 = vunpack.c.l.b16 %v314
      %v933 = vunpack.c.l.b16 %v315
      %v934 = vunpack.c.l.b16 %v316
      %v935 = vunpack.c.l.b16 %v317
      %v936 = vunpack.c.l.b16 %v318
      %v937 = vunpack.c.l.b16 %v319
      %v938 = vunpack.c.l.b16 %v320
      %v939 = vunpack.c.l.b16 %v321
      %v940 = vunpack.c.l.b16 %v322
      %v941 = vunpack.c.l.b16 %v323
      %v942 = vunpack.c.l.b16 %v324
      %v943 = vpack.c.b16 %v925, %v924
      %v944 = vpack.c.b16 %v927, %v926
      %v945 = vpack.c.b16 %v929, %v928
      %v946 = vpack.c.b16 %v931, %v930
      %v947 = vpack.c.b16 %v933, %v932
      %v948 = vpack.c.b16 %v935, %v934
      %v949 = vpack.c.b16 %v937, %v936
      %v950 = vpack.c.b16 %v939, %v938
      %v951 = vpack.c.b16 %v941, %v940
      %v952 = vpack.c.b16 %v942, %v942
      %vm962 = vcmask 154624
      %v964 = vsel %vm962, %v714, 0
      %v967 = vsel %vm962, %v716, 0
      %v970 = vsel %vm962, %v718, 0
      %v973 = vsel %vm962, %v720, 0
      %v976 = vsel %vm962, %v722, 0
      %v979 = vsel %vm962, %v724, 0
      %v982 = vsel %vm962, %v726, 0
      %v985 = vsel %vm962, %v728, 0
      %v988 = vsel %vm962, %v730, 0
      %v991 = vsel %vm962, %v732, 0
      %v994 = vsel %vm962, %v734, 0
      %v997 = vsel %vm962, %v736, 0
      %v1000 = vsel %vm962, %v738, 0
      %v1003 = vsel %vm962, %v740, 0
      %v1006 = vsel %vm962, %v742, 0
      %v1009 = vsel %vm962, %v744, 0
      %v1012 = vsel %vm962, %v746, 0
      %v1015 = vsel %vm962, %v748, 0
      %v1018 = vsel %vm962, %v750, 0
      %v1021 = vsel %vm962, %v752, 0
      %v1024 = vsel %vm962, %v754, 0
      %v1027 = vsel %vm962, %v756, 0
      %v1030 = vsel %vm962, %v758, 0
      %v1033 = vsel %vm962, %v760, 0
      %v1036 = vsel %vm962, %v762, 0
      %v1039 = vsel %vm962, %v764, 0
      %v1042 = vsel %vm962, %v766, 0
      %v1045 = vsel %vm962, %v768, 0
      %v1048 = vsel %vm962, %v770, 0
      %v1051 = vsel %vm962, %v772, 0
      %v1054 = vsel %vm962, %v774, 0
      %v1057 = vsel %vm962, %v776, 0
      %v1060 = vsel %vm962, %v778, 0
      %v1063 = vsel %vm962, %v780, 0
      %v1066 = vsel %vm962, %v782, 0
      %v1069 = vsel %vm962, %v784, 0
      %v1072 = vsel %vm962, %v786, 0
      %v1075 = vsel %vm962, %v788, 0
      %v1078 = vsel %vm962, %v790, 0
      %v1081 = vsel %vm962, %v792, 0
      %v1084 = vsel %vm962, %v794, 0
      %v1087 = vsel %vm962, %v796, 0
      %v1090 = vsel %vm962, %v798, 0
      %v1093 = vsel %vm962, %v800, 0
      %v1096 = vsel %vm962, %v802, 0
      %v1099 = vsel %vm962, %v804, 0
      %v1102 = vsel %vm962, %v806, 0
      %v1105 = vsel %vm962, %v808, 0
      %v1108 = vsel %vm962, %v810, 0
      %v1111 = vsel %vm962, %v812, 0
      %v1114 = vsel %vm962, %v814, 0
      %v1117 = vsel %vm962, %v816, 0
      %v1120 = vsel %vm962, %v818, 0
      %v1123 = vsel %vm962, %v820, 0
      %v1126 = vsel %vm962, %v822, 0
      %v1129 = vsel %vm962, %v824, 0
      %v1132 = vsel %vm962, %v826, 0
      %v1135 = vsel %vm962, %v828, 0
      %v1138 = vsel %vm962, %v830, 0
      %v1141 = vsel %vm962, %v832, 0
      %v1144 = vsel %vm962, %v834, 0
      %v1147 = vsel %vm962, %v836, 0
      %v1150 = vsel %vm962, %v838, 0
      %v1153 = vsel %vm962, %v840, 0
      %vm1155 = vcmask 1040384
      %vm1156 = vcmask 1041408
      %v1157 = vsel %vm1155, 4294967295, 65535
      %v1158 = vsel %vm1156, %v1157, 0
      %v1160 = vand.u32 %v952, %v1158
      %1162 = vmatpush.bf16.msra.mxu0 %v950
      %1163 = vmatpush.bf16.msra.mxu0 %v949
      %1164 = vmatpush.bf16.msra.mxu0 %v948
      %1165 = vmatpush.bf16.msra.mxu0 %v947
      %1166 = vmatpush.bf16.msra.mxu0 %v946
      %1167 = vmatpush.bf16.msra.mxu0 %v945
      %1168 = vmatpush.bf16.msra.mxu0 %v944
      %1169 = vmatpush.bf16.msra.mxu0 %v943
      %1170 = vmatmul.bf16.gmra.mxu0 %v713
      %v1171 = vpop.f32.mrf.mxu0
      %v1172 = vadd.f32 %v327, %v1171
      %v1173 = vpop.f32.mrf.mxu0
      %v1174 = vadd.f32 %v327, %v1173
      %1175 = vmatmul.bf16.gmra.mxu0 %v715
      %v1176 = vpop.f32.mrf.mxu0
      %v1177 = vadd.f32 %v327, %v1176
      %v1178 = vpop.f32.mrf.mxu0
      %v1179 = vadd.f32 %v327, %v1178
      %1180 = vmatmul.bf16.gmra.mxu0 %v717
      %v1181 = vpop.f32.mrf.mxu0
      %v1182 = vadd.f32 %v327, %v1181
      %v1183 = vpop.f32.mrf.mxu0
      %v1184 = vadd.f32 %v327, %v1183
      %1185 = vmatmul.bf16.gmra.mxu0 %v719
      %v1186 = vpop.f32.mrf.mxu0
      %v1187 = vadd.f32 %v327, %v1186
      %v1188 = vpop.f32.mrf.mxu0
      %v1189 = vadd.f32 %v327, %v1188
      %1190 = vmatmul.bf16.gmra.mxu0 %v721
      %v1191 = vpop.f32.mrf.mxu0
      %v1192 = vadd.f32 %v327, %v1191
      %v1193 = vpop.f32.mrf.mxu0
      %v1194 = vadd.f32 %v327, %v1193
      %1195 = vmatmul.bf16.gmra.mxu0 %v723
      %v1196 = vpop.f32.mrf.mxu0
      %v1197 = vadd.f32 %v327, %v1196
      %v1198 = vpop.f32.mrf.mxu0
      %v1199 = vadd.f32 %v327, %v1198
      %1200 = vmatmul.bf16.gmra.mxu0 %v725
      %v1201 = vpop.f32.mrf.mxu0
      %v1202 = vadd.f32 %v327, %v1201
      %v1203 = vpop.f32.mrf.mxu0
      %v1204 = vadd.f32 %v327, %v1203
      %1205 = vmatmul.bf16.gmra.mxu0 %v727
      %v1206 = vpop.f32.mrf.mxu0
      %v1207 = vadd.f32 %v327, %v1206
      %v1208 = vpop.f32.mrf.mxu0
      %v1209 = vadd.f32 %v327, %v1208
      %1210 = vmatmul.bf16.gmra.mxu0 %v729
      %v1211 = vpop.f32.mrf.mxu0
      %v1212 = vadd.f32 %v327, %v1211
      %v1213 = vpop.f32.mrf.mxu0
      %v1214 = vadd.f32 %v327, %v1213
      %1215 = vmatmul.bf16.gmra.mxu0 %v731
      %v1216 = vpop.f32.mrf.mxu0
      %v1217 = vadd.f32 %v327, %v1216
      %v1218 = vpop.f32.mrf.mxu0
      %v1219 = vadd.f32 %v327, %v1218
      %1220 = vmatmul.bf16.gmra.mxu0 %v733
      %v1221 = vpop.f32.mrf.mxu0
      %v1222 = vadd.f32 %v327, %v1221
      %v1223 = vpop.f32.mrf.mxu0
      %v1224 = vadd.f32 %v327, %v1223
      %1225 = vmatmul.bf16.gmra.mxu0 %v735
      %v1226 = vpop.f32.mrf.mxu0
      %v1227 = vadd.f32 %v327, %v1226
      %v1228 = vpop.f32.mrf.mxu0
      %v1229 = vadd.f32 %v327, %v1228
      %1230 = vmatmul.bf16.gmra.mxu0 %v737
      %v1231 = vpop.f32.mrf.mxu0
      %v1232 = vadd.f32 %v327, %v1231
      %v1233 = vpop.f32.mrf.mxu0
      %v1234 = vadd.f32 %v327, %v1233
      %1235 = vmatmul.bf16.gmra.mxu0 %v739
      %v1236 = vpop.f32.mrf.mxu0
      %v1237 = vadd.f32 %v327, %v1236
      %v1238 = vpop.f32.mrf.mxu0
      %v1239 = vadd.f32 %v327, %v1238
      %1240 = vmatmul.bf16.gmra.mxu0 %v741
      %v1241 = vpop.f32.mrf.mxu0
      %v1242 = vadd.f32 %v327, %v1241
      %v1243 = vpop.f32.mrf.mxu0
      %v1244 = vadd.f32 %v327, %v1243
      %1245 = vmatmul.bf16.gmra.mxu0 %v743
      %v1246 = vpop.f32.mrf.mxu0
      %v1247 = vadd.f32 %v327, %v1246
      %v1248 = vpop.f32.mrf.mxu0
      %v1249 = vadd.f32 %v327, %v1248
      %1250 = vmatmul.bf16.gmra.mxu0 %v745
      %v1251 = vpop.f32.mrf.mxu0
      %v1252 = vadd.f32 %v327, %v1251
      %v1253 = vpop.f32.mrf.mxu0
      %v1254 = vadd.f32 %v327, %v1253
      %1255 = vmatmul.bf16.gmra.mxu0 %v747
      %v1256 = vpop.f32.mrf.mxu0
      %v1257 = vadd.f32 %v327, %v1256
      %v1258 = vpop.f32.mrf.mxu0
      %v1259 = vadd.f32 %v327, %v1258
      %1260 = vmatmul.bf16.gmra.mxu0 %v749
      %v1261 = vpop.f32.mrf.mxu0
      %v1262 = vadd.f32 %v327, %v1261
      %v1263 = vpop.f32.mrf.mxu0
      %v1264 = vadd.f32 %v327, %v1263
      %1265 = vmatmul.bf16.gmra.mxu0 %v751
      %v1266 = vpop.f32.mrf.mxu0
      %v1267 = vadd.f32 %v327, %v1266
      %v1268 = vpop.f32.mrf.mxu0
      %v1269 = vadd.f32 %v327, %v1268
      %1270 = vmatmul.bf16.gmra.mxu0 %v753
      %v1271 = vpop.f32.mrf.mxu0
      %v1272 = vadd.f32 %v327, %v1271
      %v1273 = vpop.f32.mrf.mxu0
      %v1274 = vadd.f32 %v327, %v1273
      %1275 = vmatmul.bf16.gmra.mxu0 %v755
      %v1276 = vpop.f32.mrf.mxu0
      %v1277 = vadd.f32 %v327, %v1276
      %v1278 = vpop.f32.mrf.mxu0
      %v1279 = vadd.f32 %v327, %v1278
      %1280 = vmatmul.bf16.gmra.mxu0 %v757
      %v1281 = vpop.f32.mrf.mxu0
      %v1282 = vadd.f32 %v327, %v1281
      %v1283 = vpop.f32.mrf.mxu0
      %v1284 = vadd.f32 %v327, %v1283
      %1285 = vmatmul.bf16.gmra.mxu0 %v759
      %v1286 = vpop.f32.mrf.mxu0
      %v1287 = vadd.f32 %v327, %v1286
      %v1288 = vpop.f32.mrf.mxu0
      %v1289 = vadd.f32 %v327, %v1288
      %1290 = vmatmul.bf16.gmra.mxu0 %v761
      %v1291 = vpop.f32.mrf.mxu0
      %v1292 = vadd.f32 %v327, %v1291
      %v1293 = vpop.f32.mrf.mxu0
      %v1294 = vadd.f32 %v327, %v1293
      %1295 = vmatmul.bf16.gmra.mxu0 %v763
      %v1296 = vpop.f32.mrf.mxu0
      %v1297 = vadd.f32 %v327, %v1296
      %v1298 = vpop.f32.mrf.mxu0
      %v1299 = vadd.f32 %v327, %v1298
      %1300 = vmatmul.bf16.gmra.mxu0 %v765
      %v1301 = vpop.f32.mrf.mxu0
      %v1302 = vadd.f32 %v327, %v1301
      %v1303 = vpop.f32.mrf.mxu0
      %v1304 = vadd.f32 %v327, %v1303
      %1305 = vmatmul.bf16.gmra.mxu0 %v767
      %v1306 = vpop.f32.mrf.mxu0
      %v1307 = vadd.f32 %v327, %v1306
      %v1308 = vpop.f32.mrf.mxu0
      %v1309 = vadd.f32 %v327, %v1308
      %1310 = vmatmul.bf16.gmra.mxu0 %v769
      %v1311 = vpop.f32.mrf.mxu0
      %v1312 = vadd.f32 %v327, %v1311
      %v1313 = vpop.f32.mrf.mxu0
      %v1314 = vadd.f32 %v327, %v1313
      %1315 = vmatmul.bf16.gmra.mxu0 %v771
      %v1316 = vpop.f32.mrf.mxu0
      %v1317 = vadd.f32 %v327, %v1316
      %v1318 = vpop.f32.mrf.mxu0
      %v1319 = vadd.f32 %v327, %v1318
      %1320 = vmatmul.bf16.gmra.mxu0 %v773
      %v1321 = vpop.f32.mrf.mxu0
      %v1322 = vadd.f32 %v327, %v1321
      %v1323 = vpop.f32.mrf.mxu0
      %v1324 = vadd.f32 %v327, %v1323
      %1325 = vmatmul.bf16.gmra.mxu0 %v775
      %v1326 = vpop.f32.mrf.mxu0
      %v1327 = vadd.f32 %v327, %v1326
      %v1328 = vpop.f32.mrf.mxu0
      %v1329 = vadd.f32 %v327, %v1328
      %1330 = vmatmul.bf16.gmra.mxu0 %v777
      %v1331 = vpop.f32.mrf.mxu0
      %v1332 = vadd.f32 %v327, %v1331
      %v1333 = vpop.f32.mrf.mxu0
      %v1334 = vadd.f32 %v327, %v1333
      %1335 = vmatmul.bf16.gmra.mxu0 %v779
      %v1336 = vpop.f32.mrf.mxu0
      %v1337 = vadd.f32 %v327, %v1336
      %v1338 = vpop.f32.mrf.mxu0
      %v1339 = vadd.f32 %v327, %v1338
      %1340 = vmatmul.bf16.gmra.mxu0 %v781
      %v1341 = vpop.f32.mrf.mxu0
      %v1342 = vadd.f32 %v327, %v1341
      %v1343 = vpop.f32.mrf.mxu0
      %v1344 = vadd.f32 %v327, %v1343
      %1345 = vmatmul.bf16.gmra.mxu0 %v783
      %v1346 = vpop.f32.mrf.mxu0
      %v1347 = vadd.f32 %v327, %v1346
      %v1348 = vpop.f32.mrf.mxu0
      %v1349 = vadd.f32 %v327, %v1348
      %1350 = vmatmul.bf16.gmra.mxu0 %v785
      %v1351 = vpop.f32.mrf.mxu0
      %v1352 = vadd.f32 %v327, %v1351
      %v1353 = vpop.f32.mrf.mxu0
      %v1354 = vadd.f32 %v327, %v1353
      %1355 = vmatmul.bf16.gmra.mxu0 %v787
      %v1356 = vpop.f32.mrf.mxu0
      %v1357 = vadd.f32 %v327, %v1356
      %v1358 = vpop.f32.mrf.mxu0
      %v1359 = vadd.f32 %v327, %v1358
      %1360 = vmatmul.bf16.gmra.mxu0 %v789
      %v1361 = vpop.f32.mrf.mxu0
      %v1362 = vadd.f32 %v327, %v1361
      %v1363 = vpop.f32.mrf.mxu0
      %v1364 = vadd.f32 %v327, %v1363
      %1365 = vmatmul.bf16.gmra.mxu0 %v791
      %v1366 = vpop.f32.mrf.mxu0
      %v1367 = vadd.f32 %v327, %v1366
      %v1368 = vpop.f32.mrf.mxu0
      %v1369 = vadd.f32 %v327, %v1368
      %1370 = vmatmul.bf16.gmra.mxu0 %v793
      %v1371 = vpop.f32.mrf.mxu0
      %v1372 = vadd.f32 %v327, %v1371
      %v1373 = vpop.f32.mrf.mxu0
      %v1374 = vadd.f32 %v327, %v1373
      %1375 = vmatmul.bf16.gmra.mxu0 %v795
      %v1376 = vpop.f32.mrf.mxu0
      %v1377 = vadd.f32 %v327, %v1376
      %v1378 = vpop.f32.mrf.mxu0
      %v1379 = vadd.f32 %v327, %v1378
      %1380 = vmatmul.bf16.gmra.mxu0 %v797
      %v1381 = vpop.f32.mrf.mxu0
      %v1382 = vadd.f32 %v327, %v1381
      %v1383 = vpop.f32.mrf.mxu0
      %v1384 = vadd.f32 %v327, %v1383
      %1385 = vmatmul.bf16.gmra.mxu0 %v799
      %v1386 = vpop.f32.mrf.mxu0
      %v1387 = vadd.f32 %v327, %v1386
      %v1388 = vpop.f32.mrf.mxu0
      %v1389 = vadd.f32 %v327, %v1388
      %1390 = vmatmul.bf16.gmra.mxu0 %v801
      %v1391 = vpop.f32.mrf.mxu0
      %v1392 = vadd.f32 %v327, %v1391
      %v1393 = vpop.f32.mrf.mxu0
      %v1394 = vadd.f32 %v327, %v1393
      %1395 = vmatmul.bf16.gmra.mxu0 %v803
      %v1396 = vpop.f32.mrf.mxu0
      %v1397 = vadd.f32 %v327, %v1396
      %v1398 = vpop.f32.mrf.mxu0
      %v1399 = vadd.f32 %v327, %v1398
      %1400 = vmatmul.bf16.gmra.mxu0 %v805
      %v1401 = vpop.f32.mrf.mxu0
      %v1402 = vadd.f32 %v327, %v1401
      %v1403 = vpop.f32.mrf.mxu0
      %v1404 = vadd.f32 %v327, %v1403
      %1405 = vmatmul.bf16.gmra.mxu0 %v807
      %v1406 = vpop.f32.mrf.mxu0
      %v1407 = vadd.f32 %v327, %v1406
      %v1408 = vpop.f32.mrf.mxu0
      %v1409 = vadd.f32 %v327, %v1408
      %1410 = vmatmul.bf16.gmra.mxu0 %v809
      %v1411 = vpop.f32.mrf.mxu0
      %v1412 = vadd.f32 %v327, %v1411
      %v1413 = vpop.f32.mrf.mxu0
      %v1414 = vadd.f32 %v327, %v1413
      %1415 = vmatmul.bf16.gmra.mxu0 %v811
      %v1416 = vpop.f32.mrf.mxu0
      %v1417 = vadd.f32 %v327, %v1416
      %v1418 = vpop.f32.mrf.mxu0
      %v1419 = vadd.f32 %v327, %v1418
      %1420 = vmatmul.bf16.gmra.mxu0 %v813
      %v1421 = vpop.f32.mrf.mxu0
      %v1422 = vadd.f32 %v327, %v1421
      %v1423 = vpop.f32.mrf.mxu0
      %v1424 = vadd.f32 %v327, %v1423
      %1425 = vmatmul.bf16.gmra.mxu0 %v815
      %v1426 = vpop.f32.mrf.mxu0
      %v1427 = vadd.f32 %v327, %v1426
      %v1428 = vpop.f32.mrf.mxu0
      %v1429 = vadd.f32 %v327, %v1428
      %1430 = vmatmul.bf16.gmra.mxu0 %v817
      %v1431 = vpop.f32.mrf.mxu0
      %v1432 = vadd.f32 %v327, %v1431
      %v1433 = vpop.f32.mrf.mxu0
      %v1434 = vadd.f32 %v327, %v1433
      %1435 = vmatmul.bf16.gmra.mxu0 %v819
      %v1436 = vpop.f32.mrf.mxu0
      %v1437 = vadd.f32 %v327, %v1436
      %v1438 = vpop.f32.mrf.mxu0
      %v1439 = vadd.f32 %v327, %v1438
      %1440 = vmatmul.bf16.gmra.mxu0 %v821
      %v1441 = vpop.f32.mrf.mxu0
      %v1442 = vadd.f32 %v327, %v1441
      %v1443 = vpop.f32.mrf.mxu0
      %v1444 = vadd.f32 %v327, %v1443
      %1445 = vmatmul.bf16.gmra.mxu0 %v823
      %v1446 = vpop.f32.mrf.mxu0
      %v1447 = vadd.f32 %v327, %v1446
      %v1448 = vpop.f32.mrf.mxu0
      %v1449 = vadd.f32 %v327, %v1448
      %1450 = vmatmul.bf16.gmra.mxu0 %v825
      %v1451 = vpop.f32.mrf.mxu0
      %v1452 = vadd.f32 %v327, %v1451
      %v1453 = vpop.f32.mrf.mxu0
      %v1454 = vadd.f32 %v327, %v1453
      %1455 = vmatmul.bf16.gmra.mxu0 %v827
      %v1456 = vpop.f32.mrf.mxu0
      %v1457 = vadd.f32 %v327, %v1456
      %v1458 = vpop.f32.mrf.mxu0
      %v1459 = vadd.f32 %v327, %v1458
      %1460 = vmatmul.bf16.gmra.mxu0 %v829
      %v1461 = vpop.f32.mrf.mxu0
      %v1462 = vadd.f32 %v327, %v1461
      %v1463 = vpop.f32.mrf.mxu0
      %v1464 = vadd.f32 %v327, %v1463
      %1465 = vmatmul.bf16.gmra.mxu0 %v831
      %v1466 = vpop.f32.mrf.mxu0
      %v1467 = vadd.f32 %v327, %v1466
      %v1468 = vpop.f32.mrf.mxu0
      %v1469 = vadd.f32 %v327, %v1468
      %1470 = vmatmul.bf16.gmra.mxu0 %v833
      %v1471 = vpop.f32.mrf.mxu0
      %v1472 = vadd.f32 %v327, %v1471
      %v1473 = vpop.f32.mrf.mxu0
      %v1474 = vadd.f32 %v327, %v1473
      %1475 = vmatmul.bf16.gmra.mxu0 %v835
      %v1476 = vpop.f32.mrf.mxu0
      %v1477 = vadd.f32 %v327, %v1476
      %v1478 = vpop.f32.mrf.mxu0
      %v1479 = vadd.f32 %v327, %v1478
      %1480 = vmatmul.bf16.gmra.mxu0 %v837
      %v1481 = vpop.f32.mrf.mxu0
      %v1482 = vadd.f32 %v327, %v1481
      %v1483 = vpop.f32.mrf.mxu0
      %v1484 = vadd.f32 %v327, %v1483
      %1485 = vmatmul.bf16.gmra.mxu0 %v839
      %v1486 = vpop.f32.mrf.mxu0
      %v1487 = vadd.f32 %v327, %v1486
      %v1488 = vpop.f32.mrf.mxu0
      %v1489 = vadd.f32 %v327, %v1488
      %1490 = vdwg.mxu0
      %1491 = vmatpush.bf16.msra.mxu0 0
      %1492 = vmatpush.bf16.msra.mxu0 0
      %1493 = vmatpush.bf16.msra.mxu0 0
      %1494 = vmatpush.bf16.msra.mxu0 0
      %1495 = vmatpush.bf16.msra.mxu0 0
      %1496 = vmatpush.bf16.msra.mxu0 0
      %1497 = vmatpush.bf16.msra.mxu0 %v1160
      %1498 = vmatpush.bf16.msra.mxu0 %v951
      %1499 = vmatmul.bf16.gmra.mxu0 %v964
      %v1500 = vpop.f32.mrf.mxu0
      %v1501 = vadd.f32 %v1172, %v1500
      %v1502 = vpop.f32.mrf.mxu0
      %v1503 = vadd.f32 %v1174, %v1502
      %1504 = vmatmul.bf16.gmra.mxu0 %v967
      %v1505 = vpop.f32.mrf.mxu0
      %v1506 = vadd.f32 %v1177, %v1505
      %v1507 = vpop.f32.mrf.mxu0
      %v1508 = vadd.f32 %v1179, %v1507
      %1509 = vmatmul.bf16.gmra.mxu0 %v970
      %v1510 = vpop.f32.mrf.mxu0
      %v1511 = vadd.f32 %v1182, %v1510
      %v1512 = vpop.f32.mrf.mxu0
      %v1513 = vadd.f32 %v1184, %v1512
      %1514 = vmatmul.bf16.gmra.mxu0 %v973
      %v1515 = vpop.f32.mrf.mxu0
      %v1516 = vadd.f32 %v1187, %v1515
      %v1517 = vpop.f32.mrf.mxu0
      %v1518 = vadd.f32 %v1189, %v1517
      %1519 = vmatmul.bf16.gmra.mxu0 %v976
      %v1520 = vpop.f32.mrf.mxu0
      %v1521 = vadd.f32 %v1192, %v1520
      %v1522 = vpop.f32.mrf.mxu0
      %v1523 = vadd.f32 %v1194, %v1522
      %1524 = vmatmul.bf16.gmra.mxu0 %v979
      %v1525 = vpop.f32.mrf.mxu0
      %v1526 = vadd.f32 %v1197, %v1525
      %v1527 = vpop.f32.mrf.mxu0
      %v1528 = vadd.f32 %v1199, %v1527
      %1529 = vmatmul.bf16.gmra.mxu0 %v982
      %v1530 = vpop.f32.mrf.mxu0
      %v1531 = vadd.f32 %v1202, %v1530
      %v1532 = vpop.f32.mrf.mxu0
      %v1533 = vadd.f32 %v1204, %v1532
      %1534 = vmatmul.bf16.gmra.mxu0 %v985
      %v1535 = vpop.f32.mrf.mxu0
      %v1536 = vadd.f32 %v1207, %v1535
      %v1537 = vpop.f32.mrf.mxu0
      %v1538 = vadd.f32 %v1209, %v1537
      %1539 = vmatmul.bf16.gmra.mxu0 %v988
      %v1540 = vpop.f32.mrf.mxu0
      %v1541 = vadd.f32 %v1212, %v1540
      %v1542 = vpop.f32.mrf.mxu0
      %v1543 = vadd.f32 %v1214, %v1542
      %1544 = vmatmul.bf16.gmra.mxu0 %v991
      %v1545 = vpop.f32.mrf.mxu0
      %v1546 = vadd.f32 %v1217, %v1545
      %v1547 = vpop.f32.mrf.mxu0
      %v1548 = vadd.f32 %v1219, %v1547
      %1549 = vmatmul.bf16.gmra.mxu0 %v994
      %v1550 = vpop.f32.mrf.mxu0
      %v1551 = vadd.f32 %v1222, %v1550
      %v1552 = vpop.f32.mrf.mxu0
      %v1553 = vadd.f32 %v1224, %v1552
      %1554 = vmatmul.bf16.gmra.mxu0 %v997
      %v1555 = vpop.f32.mrf.mxu0
      %v1556 = vadd.f32 %v1227, %v1555
      %v1557 = vpop.f32.mrf.mxu0
      %v1558 = vadd.f32 %v1229, %v1557
      %1559 = vmatmul.bf16.gmra.mxu0 %v1000
      %v1560 = vpop.f32.mrf.mxu0
      %v1561 = vadd.f32 %v1232, %v1560
      %v1562 = vpop.f32.mrf.mxu0
      %v1563 = vadd.f32 %v1234, %v1562
      %1564 = vmatmul.bf16.gmra.mxu0 %v1003
      %v1565 = vpop.f32.mrf.mxu0
      %v1566 = vadd.f32 %v1237, %v1565
      %v1567 = vpop.f32.mrf.mxu0
      %v1568 = vadd.f32 %v1239, %v1567
      %1569 = vmatmul.bf16.gmra.mxu0 %v1006
      %v1570 = vpop.f32.mrf.mxu0
      %v1571 = vadd.f32 %v1242, %v1570
      %v1572 = vpop.f32.mrf.mxu0
      %v1573 = vadd.f32 %v1244, %v1572
      %1574 = vmatmul.bf16.gmra.mxu0 %v1009
      %v1575 = vpop.f32.mrf.mxu0
      %v1576 = vadd.f32 %v1247, %v1575
      %v1577 = vpop.f32.mrf.mxu0
      %v1578 = vadd.f32 %v1249, %v1577
      %1579 = vmatmul.bf16.gmra.mxu0 %v1012
      %v1580 = vpop.f32.mrf.mxu0
      %v1581 = vadd.f32 %v1252, %v1580
      %v1582 = vpop.f32.mrf.mxu0
      %v1583 = vadd.f32 %v1254, %v1582
      %1584 = vmatmul.bf16.gmra.mxu0 %v1015
      %v1585 = vpop.f32.mrf.mxu0
      %v1586 = vadd.f32 %v1257, %v1585
      %v1587 = vpop.f32.mrf.mxu0
      %v1588 = vadd.f32 %v1259, %v1587
      %1589 = vmatmul.bf16.gmra.mxu0 %v1018
      %v1590 = vpop.f32.mrf.mxu0
      %v1591 = vadd.f32 %v1262, %v1590
      %v1592 = vpop.f32.mrf.mxu0
      %v1593 = vadd.f32 %v1264, %v1592
      %1594 = vmatmul.bf16.gmra.mxu0 %v1021
      %v1595 = vpop.f32.mrf.mxu0
      %v1596 = vadd.f32 %v1267, %v1595
      %v1597 = vpop.f32.mrf.mxu0
      %v1598 = vadd.f32 %v1269, %v1597
      %1599 = vmatmul.bf16.gmra.mxu0 %v1024
      %v1600 = vpop.f32.mrf.mxu0
      %v1601 = vadd.f32 %v1272, %v1600
      %v1602 = vpop.f32.mrf.mxu0
      %v1603 = vadd.f32 %v1274, %v1602
      %1604 = vmatmul.bf16.gmra.mxu0 %v1027
      %v1605 = vpop.f32.mrf.mxu0
      %v1606 = vadd.f32 %v1277, %v1605
      %v1607 = vpop.f32.mrf.mxu0
      %v1608 = vadd.f32 %v1279, %v1607
      %1609 = vmatmul.bf16.gmra.mxu0 %v1030
      %v1610 = vpop.f32.mrf.mxu0
      %v1611 = vadd.f32 %v1282, %v1610
      %v1612 = vpop.f32.mrf.mxu0
      %v1613 = vadd.f32 %v1284, %v1612
      %1614 = vmatmul.bf16.gmra.mxu0 %v1033
      %v1615 = vpop.f32.mrf.mxu0
      %v1616 = vadd.f32 %v1287, %v1615
      %v1617 = vpop.f32.mrf.mxu0
      %v1618 = vadd.f32 %v1289, %v1617
      %1619 = vmatmul.bf16.gmra.mxu0 %v1036
      %v1620 = vpop.f32.mrf.mxu0
      %v1621 = vadd.f32 %v1292, %v1620
      %v1622 = vpop.f32.mrf.mxu0
      %v1623 = vadd.f32 %v1294, %v1622
      %1624 = vmatmul.bf16.gmra.mxu0 %v1039
      %v1625 = vpop.f32.mrf.mxu0
      %v1626 = vadd.f32 %v1297, %v1625
      %v1627 = vpop.f32.mrf.mxu0
      %v1628 = vadd.f32 %v1299, %v1627
      %1629 = vmatmul.bf16.gmra.mxu0 %v1042
      %v1630 = vpop.f32.mrf.mxu0
      %v1631 = vadd.f32 %v1302, %v1630
      %v1632 = vpop.f32.mrf.mxu0
      %v1633 = vadd.f32 %v1304, %v1632
      %1634 = vmatmul.bf16.gmra.mxu0 %v1045
      %v1635 = vpop.f32.mrf.mxu0
      %v1636 = vadd.f32 %v1307, %v1635
      %v1637 = vpop.f32.mrf.mxu0
      %v1638 = vadd.f32 %v1309, %v1637
      %1639 = vmatmul.bf16.gmra.mxu0 %v1048
      %v1640 = vpop.f32.mrf.mxu0
      %v1641 = vadd.f32 %v1312, %v1640
      %v1642 = vpop.f32.mrf.mxu0
      %v1643 = vadd.f32 %v1314, %v1642
      %1644 = vmatmul.bf16.gmra.mxu0 %v1051
      %v1645 = vpop.f32.mrf.mxu0
      %v1646 = vadd.f32 %v1317, %v1645
      %v1647 = vpop.f32.mrf.mxu0
      %v1648 = vadd.f32 %v1319, %v1647
      %1649 = vmatmul.bf16.gmra.mxu0 %v1054
      %v1650 = vpop.f32.mrf.mxu0
      %v1651 = vadd.f32 %v1322, %v1650
      %v1652 = vpop.f32.mrf.mxu0
      %v1653 = vadd.f32 %v1324, %v1652
      %1654 = vmatmul.bf16.gmra.mxu0 %v1057
      %v1655 = vpop.f32.mrf.mxu0
      %v1656 = vadd.f32 %v1327, %v1655
      %v1657 = vpop.f32.mrf.mxu0
      %v1658 = vadd.f32 %v1329, %v1657
      %1659 = vmatmul.bf16.gmra.mxu0 %v1060
      %v1660 = vpop.f32.mrf.mxu0
      %v1661 = vadd.f32 %v1332, %v1660
      %v1662 = vpop.f32.mrf.mxu0
      %v1663 = vadd.f32 %v1334, %v1662
      %1664 = vmatmul.bf16.gmra.mxu0 %v1063
      %v1665 = vpop.f32.mrf.mxu0
      %v1666 = vadd.f32 %v1337, %v1665
      %v1667 = vpop.f32.mrf.mxu0
      %v1668 = vadd.f32 %v1339, %v1667
      %1669 = vmatmul.bf16.gmra.mxu0 %v1066
      %v1670 = vpop.f32.mrf.mxu0
      %v1671 = vadd.f32 %v1342, %v1670
      %v1672 = vpop.f32.mrf.mxu0
      %v1673 = vadd.f32 %v1344, %v1672
      %1674 = vmatmul.bf16.gmra.mxu0 %v1069
      %v1675 = vpop.f32.mrf.mxu0
      %v1676 = vadd.f32 %v1347, %v1675
      %v1677 = vpop.f32.mrf.mxu0
      %v1678 = vadd.f32 %v1349, %v1677
      %1679 = vmatmul.bf16.gmra.mxu0 %v1072
      %v1680 = vpop.f32.mrf.mxu0
      %v1681 = vadd.f32 %v1352, %v1680
      %v1682 = vpop.f32.mrf.mxu0
      %v1683 = vadd.f32 %v1354, %v1682
      %1684 = vmatmul.bf16.gmra.mxu0 %v1075
      %v1685 = vpop.f32.mrf.mxu0
      %v1686 = vadd.f32 %v1357, %v1685
      %v1687 = vpop.f32.mrf.mxu0
      %v1688 = vadd.f32 %v1359, %v1687
      %1689 = vmatmul.bf16.gmra.mxu0 %v1078
      %v1690 = vpop.f32.mrf.mxu0
      %v1691 = vadd.f32 %v1362, %v1690
      %v1692 = vpop.f32.mrf.mxu0
      %v1693 = vadd.f32 %v1364, %v1692
      %1694 = vmatmul.bf16.gmra.mxu0 %v1081
      %v1695 = vpop.f32.mrf.mxu0
      %v1696 = vadd.f32 %v1367, %v1695
      %v1697 = vpop.f32.mrf.mxu0
      %v1698 = vadd.f32 %v1369, %v1697
      %1699 = vmatmul.bf16.gmra.mxu0 %v1084
      %v1700 = vpop.f32.mrf.mxu0
      %v1701 = vadd.f32 %v1372, %v1700
      %v1702 = vpop.f32.mrf.mxu0
      %v1703 = vadd.f32 %v1374, %v1702
      %1704 = vmatmul.bf16.gmra.mxu0 %v1087
      %v1705 = vpop.f32.mrf.mxu0
      %v1706 = vadd.f32 %v1377, %v1705
      %v1707 = vpop.f32.mrf.mxu0
      %v1708 = vadd.f32 %v1379, %v1707
      %1709 = vmatmul.bf16.gmra.mxu0 %v1090
      %v1710 = vpop.f32.mrf.mxu0
      %v1711 = vadd.f32 %v1382, %v1710
      %v1712 = vpop.f32.mrf.mxu0
      %v1713 = vadd.f32 %v1384, %v1712
      %1714 = vmatmul.bf16.gmra.mxu0 %v1093
      %v1715 = vpop.f32.mrf.mxu0
      %v1716 = vadd.f32 %v1387, %v1715
      %v1717 = vpop.f32.mrf.mxu0
      %v1718 = vadd.f32 %v1389, %v1717
      %1719 = vmatmul.bf16.gmra.mxu0 %v1096
      %v1720 = vpop.f32.mrf.mxu0
      %v1721 = vadd.f32 %v1392, %v1720
      %v1722 = vpop.f32.mrf.mxu0
      %v1723 = vadd.f32 %v1394, %v1722
      %1724 = vmatmul.bf16.gmra.mxu0 %v1099
      %v1725 = vpop.f32.mrf.mxu0
      %v1726 = vadd.f32 %v1397, %v1725
      %v1727 = vpop.f32.mrf.mxu0
      %v1728 = vadd.f32 %v1399, %v1727
      %1729 = vmatmul.bf16.gmra.mxu0 %v1102
      %v1730 = vpop.f32.mrf.mxu0
      %v1731 = vadd.f32 %v1402, %v1730
      %v1732 = vpop.f32.mrf.mxu0
      %v1733 = vadd.f32 %v1404, %v1732
      %1734 = vmatmul.bf16.gmra.mxu0 %v1105
      %v1735 = vpop.f32.mrf.mxu0
      %v1736 = vadd.f32 %v1407, %v1735
      %v1737 = vpop.f32.mrf.mxu0
      %v1738 = vadd.f32 %v1409, %v1737
      %1739 = vmatmul.bf16.gmra.mxu0 %v1108
      %v1740 = vpop.f32.mrf.mxu0
      %v1741 = vadd.f32 %v1412, %v1740
      %v1742 = vpop.f32.mrf.mxu0
      %v1743 = vadd.f32 %v1414, %v1742
      %1744 = vmatmul.bf16.gmra.mxu0 %v1111
      %v1745 = vpop.f32.mrf.mxu0
      %v1746 = vadd.f32 %v1417, %v1745
      %v1747 = vpop.f32.mrf.mxu0
      %v1748 = vadd.f32 %v1419, %v1747
      %1749 = vmatmul.bf16.gmra.mxu0 %v1114
      %v1750 = vpop.f32.mrf.mxu0
      %v1751 = vadd.f32 %v1422, %v1750
      %v1752 = vpop.f32.mrf.mxu0
      %v1753 = vadd.f32 %v1424, %v1752
      %1754 = vmatmul.bf16.gmra.mxu0 %v1117
      %v1755 = vpop.f32.mrf.mxu0
      %v1756 = vadd.f32 %v1427, %v1755
      %v1757 = vpop.f32.mrf.mxu0
      %v1758 = vadd.f32 %v1429, %v1757
      %1759 = vmatmul.bf16.gmra.mxu0 %v1120
      %v1760 = vpop.f32.mrf.mxu0
      %v1761 = vadd.f32 %v1432, %v1760
      %v1762 = vpop.f32.mrf.mxu0
      %v1763 = vadd.f32 %v1434, %v1762
      %1764 = vmatmul.bf16.gmra.mxu0 %v1123
      %v1765 = vpop.f32.mrf.mxu0
      %v1766 = vadd.f32 %v1437, %v1765
      %v1767 = vpop.f32.mrf.mxu0
      %v1768 = vadd.f32 %v1439, %v1767
      %1769 = vmatmul.bf16.gmra.mxu0 %v1126
      %v1770 = vpop.f32.mrf.mxu0
      %v1771 = vadd.f32 %v1442, %v1770
      %v1772 = vpop.f32.mrf.mxu0
      %v1773 = vadd.f32 %v1444, %v1772
      %1774 = vmatmul.bf16.gmra.mxu0 %v1129
      %v1775 = vpop.f32.mrf.mxu0
      %v1776 = vadd.f32 %v1447, %v1775
      %v1777 = vpop.f32.mrf.mxu0
      %v1778 = vadd.f32 %v1449, %v1777
      %1779 = vmatmul.bf16.gmra.mxu0 %v1132
      %v1780 = vpop.f32.mrf.mxu0
      %v1781 = vadd.f32 %v1452, %v1780
      %v1782 = vpop.f32.mrf.mxu0
      %v1783 = vadd.f32 %v1454, %v1782
      %1784 = vmatmul.bf16.gmra.mxu0 %v1135
      %v1785 = vpop.f32.mrf.mxu0
      %v1786 = vadd.f32 %v1457, %v1785
      %v1787 = vpop.f32.mrf.mxu0
      %v1788 = vadd.f32 %v1459, %v1787
      %1789 = vmatmul.bf16.gmra.mxu0 %v1138
      %v1790 = vpop.f32.mrf.mxu0
      %v1791 = vadd.f32 %v1462, %v1790
      %v1792 = vpop.f32.mrf.mxu0
      %v1793 = vadd.f32 %v1464, %v1792
      %1794 = vmatmul.bf16.gmra.mxu0 %v1141
      %v1795 = vpop.f32.mrf.mxu0
      %v1796 = vadd.f32 %v1467, %v1795
      %v1797 = vpop.f32.mrf.mxu0
      %v1798 = vadd.f32 %v1469, %v1797
      %1799 = vmatmul.bf16.gmra.mxu0 %v1144
      %v1800 = vpop.f32.mrf.mxu0
      %v1801 = vadd.f32 %v1472, %v1800
      %v1802 = vpop.f32.mrf.mxu0
      %v1803 = vadd.f32 %v1474, %v1802
      %1804 = vmatmul.bf16.gmra.mxu0 %v1147
      %v1805 = vpop.f32.mrf.mxu0
      %v1806 = vadd.f32 %v1477, %v1805
      %v1807 = vpop.f32.mrf.mxu0
      %v1808 = vadd.f32 %v1479, %v1807
      %1809 = vmatmul.bf16.gmra.mxu0 %v1150
      %v1810 = vpop.f32.mrf.mxu0
      %v1811 = vadd.f32 %v1482, %v1810
      %v1812 = vpop.f32.mrf.mxu0
      %v1813 = vadd.f32 %v1484, %v1812
      %1814 = vmatmul.bf16.gmra.mxu0 %v1153
      %v1815 = vpop.f32.mrf.mxu0
      %v1816 = vadd.f32 %v1487, %v1815
      %v1817 = vpop.f32.mrf.mxu0
      %v1818 = vadd.f32 %v1489, %v1817
      %1819 = vdwg.mxu0
      %v1820 = vmax.f32 %v1501, 0.0
      %v1821 = vmax.f32 %v1503, 0.0
      %v1822 = vmax.f32 %v1506, 0.0
      %v1823 = vmax.f32 %v1508, 0.0
      %v1824 = vmax.f32 %v1511, 0.0
      %v1825 = vmax.f32 %v1513, 0.0
      %v1826 = vmax.f32 %v1516, 0.0
      %v1827 = vmax.f32 %v1518, 0.0
      %v1828 = vmax.f32 %v1521, 0.0
      %v1829 = vmax.f32 %v1523, 0.0
      %v1830 = vmax.f32 %v1526, 0.0
      %v1831 = vmax.f32 %v1528, 0.0
      %v1832 = vmax.f32 %v1531, 0.0
      %v1833 = vmax.f32 %v1533, 0.0
      %v1834 = vmax.f32 %v1536, 0.0
      %v1835 = vmax.f32 %v1538, 0.0
      %v1836 = vmax.f32 %v1541, 0.0
      %v1837 = vmax.f32 %v1543, 0.0
      %v1838 = vmax.f32 %v1546, 0.0
      %v1839 = vmax.f32 %v1548, 0.0
      %v1840 = vmax.f32 %v1551, 0.0
      %v1841 = vmax.f32 %v1553, 0.0
      %v1842 = vmax.f32 %v1556, 0.0
      %v1843 = vmax.f32 %v1558, 0.0
      %v1844 = vmax.f32 %v1561, 0.0
      %v1845 = vmax.f32 %v1563, 0.0
      %v1846 = vmax.f32 %v1566, 0.0
      %v1847 = vmax.f32 %v1568, 0.0
      %v1848 = vmax.f32 %v1571, 0.0
      %v1849 = vmax.f32 %v1573, 0.0
      %v1850 = vmax.f32 %v1576, 0.0
      %v1851 = vmax.f32 %v1578, 0.0
      %v1852 = vmax.f32 %v1581, 0.0
      %v1853 = vmax.f32 %v1583, 0.0
      %v1854 = vmax.f32 %v1586, 0.0
      %v1855 = vmax.f32 %v1588, 0.0
      %v1856 = vmax.f32 %v1591, 0.0
      %v1857 = vmax.f32 %v1593, 0.0
      %v1858 = vmax.f32 %v1596, 0.0
      %v1859 = vmax.f32 %v1598, 0.0
      %v1860 = vmax.f32 %v1601, 0.0
      %v1861 = vmax.f32 %v1603, 0.0
      %v1862 = vmax.f32 %v1606, 0.0
      %v1863 = vmax.f32 %v1608, 0.0
      %v1864 = vmax.f32 %v1611, 0.0
      %v1865 = vmax.f32 %v1613, 0.0
      %v1866 = vmax.f32 %v1616, 0.0
      %v1867 = vmax.f32 %v1618, 0.0
      %v1868 = vmax.f32 %v1621, 0.0
      %v1869 = vmax.f32 %v1623, 0.0
      %v1870 = vmax.f32 %v1626, 0.0
      %v1871 = vmax.f32 %v1628, 0.0
      %v1872 = vmax.f32 %v1631, 0.0
      %v1873 = vmax.f32 %v1633, 0.0
      %v1874 = vmax.f32 %v1636, 0.0
      %v1875 = vmax.f32 %v1638, 0.0
      %v1876 = vmax.f32 %v1641, 0.0
      %v1877 = vmax.f32 %v1643, 0.0
      %v1878 = vmax.f32 %v1646, 0.0
      %v1879 = vmax.f32 %v1648, 0.0
      %v1880 = vmax.f32 %v1651, 0.0
      %v1881 = vmax.f32 %v1653, 0.0
      %v1882 = vmax.f32 %v1656, 0.0
      %v1883 = vmax.f32 %v1658, 0.0
      %v1884 = vmax.f32 %v1661, 0.0
      %v1885 = vmax.f32 %v1663, 0.0
      %v1886 = vmax.f32 %v1666, 0.0
      %v1887 = vmax.f32 %v1668, 0.0
      %v1888 = vmax.f32 %v1671, 0.0
      %v1889 = vmax.f32 %v1673, 0.0
      %v1890 = vmax.f32 %v1676, 0.0
      %v1891 = vmax.f32 %v1678, 0.0
      %v1892 = vmax.f32 %v1681, 0.0
      %v1893 = vmax.f32 %v1683, 0.0
      %v1894 = vmax.f32 %v1686, 0.0
      %v1895 = vmax.f32 %v1688, 0.0
      %v1896 = vmax.f32 %v1691, 0.0
      %v1897 = vmax.f32 %v1693, 0.0
      %v1898 = vmax.f32 %v1696, 0.0
      %v1899 = vmax.f32 %v1698, 0.0
      %v1900 = vmax.f32 %v1701, 0.0
      %v1901 = vmax.f32 %v1703, 0.0
      %v1902 = vmax.f32 %v1706, 0.0
      %v1903 = vmax.f32 %v1708, 0.0
      %v1904 = vmax.f32 %v1711, 0.0
      %v1905 = vmax.f32 %v1713, 0.0
      %v1906 = vmax.f32 %v1716, 0.0
      %v1907 = vmax.f32 %v1718, 0.0
      %v1908 = vmax.f32 %v1721, 0.0
      %v1909 = vmax.f32 %v1723, 0.0
      %v1910 = vmax.f32 %v1726, 0.0
      %v1911 = vmax.f32 %v1728, 0.0
      %v1912 = vmax.f32 %v1731, 0.0
      %v1913 = vmax.f32 %v1733, 0.0
      %v1914 = vmax.f32 %v1736, 0.0
      %v1915 = vmax.f32 %v1738, 0.0
      %v1916 = vmax.f32 %v1741, 0.0
      %v1917 = vmax.f32 %v1743, 0.0
      %v1918 = vmax.f32 %v1746, 0.0
      %v1919 = vmax.f32 %v1748, 0.0
      %v1920 = vmax.f32 %v1751, 0.0
      %v1921 = vmax.f32 %v1753, 0.0
      %v1922 = vmax.f32 %v1756, 0.0
      %v1923 = vmax.f32 %v1758, 0.0
      %v1924 = vmax.f32 %v1761, 0.0
      %v1925 = vmax.f32 %v1763, 0.0
      %v1926 = vmax.f32 %v1766, 0.0
      %v1927 = vmax.f32 %v1768, 0.0
      %v1928 = vmax.f32 %v1771, 0.0
      %v1929 = vmax.f32 %v1773, 0.0
      %v1930 = vmax.f32 %v1776, 0.0
      %v1931 = vmax.f32 %v1778, 0.0
      %v1932 = vmax.f32 %v1781, 0.0
      %v1933 = vmax.f32 %v1783, 0.0
      %v1934 = vmax.f32 %v1786, 0.0
      %v1935 = vmax.f32 %v1788, 0.0
      %v1936 = vmax.f32 %v1791, 0.0
      %v1937 = vmax.f32 %v1793, 0.0
      %v1938 = vmax.f32 %v1796, 0.0
      %v1939 = vmax.f32 %v1798, 0.0
      %v1940 = vmax.f32 %v1801, 0.0
      %v1941 = vmax.f32 %v1803, 0.0
      %v1942 = vmax.f32 %v1806, 0.0
      %v1943 = vmax.f32 %v1808, 0.0
      %v1944 = vmax.f32 %v1811, 0.0
      %v1945 = vmax.f32 %v1813, 0.0
      %v1946 = vmax.f32 %v1816, 0.0
      %v1947 = vmax.f32 %v1818, 0.0
      %vm1948 = vcmask 31744
      %1949 = vst.msk [vmem:[%s175] sm:$0xff] %vm1948, %v1820
      %1950 = vst.msk [vmem:[%s175 + $0x8] sm:$0xff] %vm1948, %v1821
      %1951 = vst.msk [vmem:[%s175 + $0x10] sm:$0xff] %vm1948, %v1822
      %1952 = vst.msk [vmem:[%s175 + $0x18] sm:$0xff] %vm1948, %v1823
      %1953 = vst.msk [vmem:[%s175 + $0x20] sm:$0xff] %vm1948, %v1824
      %1954 = vst.msk [vmem:[%s175 + $0x28] sm:$0xff] %vm1948, %v1825
      %1955 = vst.msk [vmem:[%s175 + $0x30] sm:$0xff] %vm1948, %v1826
      %1956 = vst.msk [vmem:[%s175 + $0x38] sm:$0xff] %vm1948, %v1827
      %1957 = vst.msk [vmem:[%s175 + $0x40] sm:$0xff] %vm1948, %v1828
      %1958 = vst.msk [vmem:[%s175 + $0x48] sm:$0xff] %vm1948, %v1829
      %1959 = vst.msk [vmem:[%s175 + $0x50] sm:$0xff] %vm1948, %v1830
      %1960 = vst.msk [vmem:[%s175 + $0x58] sm:$0xff] %vm1948, %v1831
      %1961 = vst.msk [vmem:[%s175 + $0x60] sm:$0xff] %vm1948, %v1832
      %1962 = vst.msk [vmem:[%s175 + $0x68] sm:$0xff] %vm1948, %v1833
      %1963 = vst.msk [vmem:[%s175 + $0x70] sm:$0xff] %vm1948, %v1834
      %1964 = vst.msk [vmem:[%s175 + $0x78] sm:$0xff] %vm1948, %v1835
      %1965 = vst.msk [vmem:[%s175 + $0x80] sm:$0xff] %vm1948, %v1836
      %1966 = vst.msk [vmem:[%s175 + $0x88] sm:$0xff] %vm1948, %v1837
      %1967 = vst.msk [vmem:[%s175 + $0x90] sm:$0xff] %vm1948, %v1838
      %1968 = vst.msk [vmem:[%s175 + $0x98] sm:$0xff] %vm1948, %v1839
      %1969 = vst.msk [vmem:[%s175 + $0xa0] sm:$0xff] %vm1948, %v1840
      %1970 = vst.msk [vmem:[%s175 + $0xa8] sm:$0xff] %vm1948, %v1841
      %1971 = vst.msk [vmem:[%s175 + $0xb0] sm:$0xff] %vm1948, %v1842
      %1972 = vst.msk [vmem:[%s175 + $0xb8] sm:$0xff] %vm1948, %v1843
      %1973 = vst.msk [vmem:[%s175 + $0xc0] sm:$0xff] %vm1948, %v1844
      %1974 = vst.msk [vmem:[%s175 + $0xc8] sm:$0xff] %vm1948, %v1845
      %1975 = vst.msk [vmem:[%s175 + $0xd0] sm:$0xff] %vm1948, %v1846
      %1976 = vst.msk [vmem:[%s175 + $0xd8] sm:$0xff] %vm1948, %v1847
      %1977 = vst.msk [vmem:[%s175 + $0xe0] sm:$0xff] %vm1948, %v1848
      %1978 = vst.msk [vmem:[%s175 + $0xe8] sm:$0xff] %vm1948, %v1849
      %1979 = vst.msk [vmem:[%s175 + $0xf0] sm:$0xff] %vm1948, %v1850
      %1980 = vst.msk [vmem:[%s175 + $0xf8] sm:$0xff] %vm1948, %v1851
      %1981 = vst.msk [vmem:[%s175 + $0x100] sm:$0xff] %vm1948, %v1852
      %1982 = vst.msk [vmem:[%s175 + $0x108] sm:$0xff] %vm1948, %v1853
      %1983 = vst.msk [vmem:[%s175 + $0x110] sm:$0xff] %vm1948, %v1854
      %1984 = vst.msk [vmem:[%s175 + $0x118] sm:$0xff] %vm1948, %v1855
      %1985 = vst.msk [vmem:[%s175 + $0x120] sm:$0xff] %vm1948, %v1856
      %1986 = vst.msk [vmem:[%s175 + $0x128] sm:$0xff] %vm1948, %v1857
      %1987 = vst.msk [vmem:[%s175 + $0x130] sm:$0xff] %vm1948, %v1858
      %1988 = vst.msk [vmem:[%s175 + $0x138] sm:$0xff] %vm1948, %v1859
      %1989 = vst.msk [vmem:[%s175 + $0x140] sm:$0xff] %vm1948, %v1860
      %1990 = vst.msk [vmem:[%s175 + $0x148] sm:$0xff] %vm1948, %v1861
      %1991 = vst.msk [vmem:[%s175 + $0x150] sm:$0xff] %vm1948, %v1862
      %1992 = vst.msk [vmem:[%s175 + $0x158] sm:$0xff] %vm1948, %v1863
      %1993 = vst.msk [vmem:[%s175 + $0x160] sm:$0xff] %vm1948, %v1864
      %1994 = vst.msk [vmem:[%s175 + $0x168] sm:$0xff] %vm1948, %v1865
      %1995 = vst.msk [vmem:[%s175 + $0x170] sm:$0xff] %vm1948, %v1866
      %1996 = vst.msk [vmem:[%s175 + $0x178] sm:$0xff] %vm1948, %v1867
      %1997 = vst.msk [vmem:[%s175 + $0x180] sm:$0xff] %vm1948, %v1868
      %1998 = vst.msk [vmem:[%s175 + $0x188] sm:$0xff] %vm1948, %v1869
      %1999 = vst.msk [vmem:[%s175 + $0x190] sm:$0xff] %vm1948, %v1870
      %2000 = vst.msk [vmem:[%s175 + $0x198] sm:$0xff] %vm1948, %v1871
      %2001 = vst.msk [vmem:[%s175 + $0x1a0] sm:$0xff] %vm1948, %v1872
      %2002 = vst.msk [vmem:[%s175 + $0x1a8] sm:$0xff] %vm1948, %v1873
      %2003 = vst.msk [vmem:[%s175 + $0x1b0] sm:$0xff] %vm1948, %v1874
      %2004 = vst.msk [vmem:[%s175 + $0x1b8] sm:$0xff] %vm1948, %v1875
      %2005 = vst.msk [vmem:[%s175 + $0x1c0] sm:$0xff] %vm1948, %v1876
      %2006 = vst.msk [vmem:[%s175 + $0x1c8] sm:$0xff] %vm1948, %v1877
      %2007 = vst.msk [vmem:[%s175 + $0x1d0] sm:$0xff] %vm1948, %v1878
      %2008 = vst.msk [vmem:[%s175 + $0x1d8] sm:$0xff] %vm1948, %v1879
      %2009 = vst.msk [vmem:[%s175 + $0x1e0] sm:$0xff] %vm1948, %v1880
      %2010 = vst.msk [vmem:[%s175 + $0x1e8] sm:$0xff] %vm1948, %v1881
      %2011 = vst.msk [vmem:[%s175 + $0x1f0] sm:$0xff] %vm1948, %v1882
      %2012 = vst.msk [vmem:[%s175 + $0x1f8] sm:$0xff] %vm1948, %v1883
      %2013 = vst.msk [vmem:[%s175 + $0x200] sm:$0xff] %vm1948, %v1884
      %2014 = vst.msk [vmem:[%s175 + $0x208] sm:$0xff] %vm1948, %v1885
      %2015 = vst.msk [vmem:[%s175 + $0x210] sm:$0xff] %vm1948, %v1886
      %2016 = vst.msk [vmem:[%s175 + $0x218] sm:$0xff] %vm1948, %v1887
      %2017 = vst.msk [vmem:[%s175 + $0x220] sm:$0xff] %vm1948, %v1888
      %2018 = vst.msk [vmem:[%s175 + $0x228] sm:$0xff] %vm1948, %v1889
      %2019 = vst.msk [vmem:[%s175 + $0x230] sm:$0xff] %vm1948, %v1890
      %2020 = vst.msk [vmem:[%s175 + $0x238] sm:$0xff] %vm1948, %v1891
      %2021 = vst.msk [vmem:[%s175 + $0x240] sm:$0xff] %vm1948, %v1892
      %2022 = vst.msk [vmem:[%s175 + $0x248] sm:$0xff] %vm1948, %v1893
      %2023 = vst.msk [vmem:[%s175 + $0x250] sm:$0xff] %vm1948, %v1894
      %2024 = vst.msk [vmem:[%s175 + $0x258] sm:$0xff] %vm1948, %v1895
      %2025 = vst.msk [vmem:[%s175 + $0x260] sm:$0xff] %vm1948, %v1896
      %2026 = vst.msk [vmem:[%s175 + $0x268] sm:$0xff] %vm1948, %v1897
      %2027 = vst.msk [vmem:[%s175 + $0x270] sm:$0xff] %vm1948, %v1898
      %2028 = vst.msk [vmem:[%s175 + $0x278] sm:$0xff] %vm1948, %v1899
      %2029 = vst.msk [vmem:[%s175 + $0x280] sm:$0xff] %vm1948, %v1900
      %2030 = vst.msk [vmem:[%s175 + $0x288] sm:$0xff] %vm1948, %v1901
      %2031 = vst.msk [vmem:[%s175 + $0x290] sm:$0xff] %vm1948, %v1902
      %2032 = vst.msk [vmem:[%s175 + $0x298] sm:$0xff] %vm1948, %v1903
      %2033 = vst.msk [vmem:[%s175 + $0x2a0] sm:$0xff] %vm1948, %v1904
      %2034 = vst.msk [vmem:[%s175 + $0x2a8] sm:$0xff] %vm1948, %v1905
      %2035 = vst.msk [vmem:[%s175 + $0x2b0] sm:$0xff] %vm1948, %v1906
      %2036 = vst.msk [vmem:[%s175 + $0x2b8] sm:$0xff] %vm1948, %v1907
      %2037 = vst.msk [vmem:[%s175 + $0x2c0] sm:$0xff] %vm1948, %v1908
      %2038 = vst.msk [vmem:[%s175 + $0x2c8] sm:$0xff] %vm1948, %v1909
      %2039 = vst.msk [vmem:[%s175 + $0x2d0] sm:$0xff] %vm1948, %v1910
      %2040 = vst.msk [vmem:[%s175 + $0x2d8] sm:$0xff] %vm1948, %v1911
      %2041 = vst.msk [vmem:[%s175 + $0x2e0] sm:$0xff] %vm1948, %v1912
      %2042 = vst.msk [vmem:[%s175 + $0x2e8] sm:$0xff] %vm1948, %v1913
      %2043 = vst.msk [vmem:[%s175 + $0x2f0] sm:$0xff] %vm1948, %v1914
      %2044 = vst.msk [vmem:[%s175 + $0x2f8] sm:$0xff] %vm1948, %v1915
      %2045 = vst.msk [vmem:[%s175 + $0x300] sm:$0xff] %vm1948, %v1916
      %2046 = vst.msk [vmem:[%s175 + $0x308] sm:$0xff] %vm1948, %v1917
      %2047 = vst.msk [vmem:[%s175 + $0x310] sm:$0xff] %vm1948, %v1918
      %2048 = vst.msk [vmem:[%s175 + $0x318] sm:$0xff] %vm1948, %v1919
      %2049 = vst.msk [vmem:[%s175 + $0x320] sm:$0xff] %vm1948, %v1920
      %2050 = vst.msk [vmem:[%s175 + $0x328] sm:$0xff] %vm1948, %v1921
      %2051 = vst.msk [vmem:[%s175 + $0x330] sm:$0xff] %vm1948, %v1922
      %2052 = vst.msk [vmem:[%s175 + $0x338] sm:$0xff] %vm1948, %v1923
      %2053 = vst.msk [vmem:[%s175 + $0x340] sm:$0xff] %vm1948, %v1924
      %2054 = vst.msk [vmem:[%s175 + $0x348] sm:$0xff] %vm1948, %v1925
      %2055 = vst.msk [vmem:[%s175 + $0x350] sm:$0xff] %vm1948, %v1926
      %2056 = vst.msk [vmem:[%s175 + $0x358] sm:$0xff] %vm1948, %v1927
      %2057 = vst.msk [vmem:[%s175 + $0x360] sm:$0xff] %vm1948, %v1928
      %2058 = vst.msk [vmem:[%s175 + $0x368] sm:$0xff] %vm1948, %v1929
      %2059 = vst.msk [vmem:[%s175 + $0x370] sm:$0xff] %vm1948, %v1930
      %2060 = vst.msk [vmem:[%s175 + $0x378] sm:$0xff] %vm1948, %v1931
      %2061 = vst.msk [vmem:[%s175 + $0x380] sm:$0xff] %vm1948, %v1932
      %2062 = vst.msk [vmem:[%s175 + $0x388] sm:$0xff] %vm1948, %v1933
      %2063 = vst.msk [vmem:[%s175 + $0x390] sm:$0xff] %vm1948, %v1934
      %2064 = vst.msk [vmem:[%s175 + $0x398] sm:$0xff] %vm1948, %v1935
      %2065 = vst.msk [vmem:[%s175 + $0x3a0] sm:$0xff] %vm1948, %v1936
      %2066 = vst.msk [vmem:[%s175 + $0x3a8] sm:$0xff] %vm1948, %v1937
      %2067 = vst.msk [vmem:[%s175 + $0x3b0] sm:$0xff] %vm1948, %v1938
      %2068 = vst.msk [vmem:[%s175 + $0x3b8] sm:$0xff] %vm1948, %v1939
      %2069 = vst.msk [vmem:[%s175 + $0x3c0] sm:$0xff] %vm1948, %v1940
      %2070 = vst.msk [vmem:[%s175 + $0x3c8] sm:$0xff] %vm1948, %v1941
      %2071 = vst.msk [vmem:[%s175 + $0x3d0] sm:$0xff] %vm1948, %v1942
      %2072 = vst.msk [vmem:[%s175 + $0x3d8] sm:$0xff] %vm1948, %v1943
      %2073 = vst.msk [vmem:[%s175 + $0x3e0] sm:$0xff] %vm1948, %v1944
      %2074 = vst.msk [vmem:[%s175 + $0x3e8] sm:$0xff] %vm1948, %v1945
      %2075 = vst.msk [vmem:[%s175 + $0x3f0] sm:$0xff] %vm1948, %v1946
      %2076 = vst.msk [vmem:[%s175 + $0x3f8] sm:$0xff] %vm1948, %v1947
      %s2077 = smul.u32 128, %s14
      %p2078 = scmp.lt.s32.totalorder %s2077, 2303
      %s2079 = scalar_select %p2078, %s2077, 2303
      %s2080 = smul.addr %s2079, 8
      %s2081 = scalar_lea.vmem %s3, %s2080
      // Predicated region
      $region33: #{tpu_custom_call.1} parent=31 // pred_check
        %p2082 = pneg %p100
      $region34: #{tpu_custom_call.1} parent=31 // pred_check_branch
        %2084 = sbr.rel (%p2082) target = $region36
      $region35: #{tpu_custom_call.1} parent=31 // pred_region
        %s2085 = smul.u32 128, %s14
      $region36: #{tpu_custom_call.1} parent=31 // pred_fallthru
        _
    $region32: #{tpu_custom_call.1} parent=5 // pred_fallthru
      _
    %p2086 = scmp.le.s32.totalorder 2, %s9
    // Predicated region
    $region37: #{tpu_custom_call.1} parent=5 // pred_check
      %p2087 = pneg %p2086
    $region38: #{tpu_custom_call.1} parent=5 // pred_check_branch
      %2089 = sbr.rel (%p2087) target = $region40
    $region39: #{tpu_custom_call.1} parent=5 // pred_region
      %s2090 = ssub.s32 %s9, 2
      // Predicated region
      $region41: #{tpu_custom_call.1} parent=39 // pred_check
        %p2091 = pneg %p106
      $region42: #{tpu_custom_call.1} parent=39 // pred_check_branch
        %2093 = sbr.rel (%p2091) target = $region44
      $region43: #{tpu_custom_call.1} parent=39 // pred_region
        %s2094 = smul.u32 128, %s15
        %p2095 = scmp.lt.s32.totalorder %s2094, 2303
        %s2096 = scalar_select %p2095, %s2094, 2303
        %s2097 = smul.addr %s2096, 8
        %s2098 = scalar_lea.vmem %s3, %s2097
      $region44: #{tpu_custom_call.1} parent=39 // pred_fallthru
        _
    $region40: #{tpu_custom_call.1} parent=5 // pred_fallthru
      _
  $region6: #{tpu_custom_call.1} parent=0 // loop_footer
    %s13 = sadd.s32 1, %s9
  $region7: #{tpu_custom_call.1} parent=0 // loop_footer_branch
    %8 = sbr.rel target = $region3
  $region8: #{tpu_custom_call.1} parent=0 // loop_exit
    _

</llo_original>
